<compile_context>
chip_gen: v7x
topology: tpu7x:2x2x1
jax: 0.10.0
libtpu: 0.0.40
codegen_flags: <defaults>
</compile_context>

<pallas_src>
import functools

import jax
import jax.numpy as jnp
from jax.experimental import pallas as pl
from jax.experimental.pallas import tpu as pltpu


def _attention_kernel(x_ref, wq_ref, wk_ref, wv_ref, wproj_ref, bproj_ref,
                      o_ref, q_s, k_s, v_s, ctx_s, *, num_heads):
    # x_ref:    (1, N, C) bf16   current batch element
    # wq/wk/wv: (C, C)    bf16   (in, out) layout; scale folded into wq
    # wproj:    (C, C)    bf16
    # bproj:    (1, C)    f32
    # o_ref:    (1, N, C) input dtype
    # q_s/k_s/v_s/ctx_s: (N, C) bf16 VMEM scratch
    x = x_ref[0]                                   # (N, C) bf16
    n, c = x.shape
    hd = c // num_heads

    # QKV projections on the MXU: bf16 operands, f32 accumulation.
    # (Scale is already folded into wq on the host.)
    q_s[...] = jnp.dot(x, wq_ref[...],
                       preferred_element_type=jnp.float32).astype(jnp.bfloat16)
    k_s[...] = jnp.dot(x, wk_ref[...],
                       preferred_element_type=jnp.float32).astype(jnp.bfloat16)
    v_s[...] = jnp.dot(x, wv_ref[...],
                       preferred_element_type=jnp.float32).astype(jnp.bfloat16)

    # Per-head attention. Operands come from Ref slices (cheap, streamed) so
    # only one head's tiles are live at a time; each head's output is stored
    # straight into the ctx scratch Ref (no concatenate).
    for h in range(num_heads):
        sl = slice(h * hd, (h + 1) * hd)
        q_h = q_s[:, sl]                           # (N, hd) bf16
        k_h = k_s[:, sl]                           # (N, hd) bf16
        v_h = v_s[:, sl]                           # (N, hd) bf16

        # q_h @ k_h^T via contraction over the head dim (no explicit transpose).
        s = jax.lax.dot_general(q_h, k_h, (((1,), (1,)), ((), ())),
                                preferred_element_type=jnp.float32)   # (N, N) f32

        # Numerically-stable softmax in f32; approx reciprocal goes to the EUP.
        m = jnp.max(s, axis=-1, keepdims=True)
        p = jnp.exp(s - m)
        p = p * pl.reciprocal(jnp.sum(p, axis=-1, keepdims=True), approx=True)
        # attn_drop(p=0.0) is identity in eval mode.

        ctx_s[:, sl] = jnp.dot(p.astype(jnp.bfloat16), v_h,
                               preferred_element_type=jnp.float32
                               ).astype(jnp.bfloat16)                 # (N, hd)

    # Output projection (bias added in f32).
    y = jnp.dot(ctx_s[...], wproj_ref[...],
                preferred_element_type=jnp.float32) + bproj_ref[...]  # (N, C)
    # proj_drop(p=0.0) is identity in eval mode.
    o_ref[0] = y.astype(o_ref.dtype)


def attention_pallas(x, w_qkv, w_proj, b_proj, *, num_heads):
    """x: (B, N, C); w_qkv: (C, 3C); w_proj: (C, C); b_proj: (C,)."""
    B, N, C = x.shape
    hd = C // num_heads
    scale = hd ** (-0.5)

    # Host-side prep: split QKV weight, fold the attention scale into the Q
    # columns, and cast matmul operands to bf16 (f32 accumulation in-kernel).
    w_q = (w_qkv[:, 0 * C:1 * C] * scale).astype(jnp.bfloat16)
    w_k = w_qkv[:, 1 * C:2 * C].astype(jnp.bfloat16)
    w_v = w_qkv[:, 2 * C:3 * C].astype(jnp.bfloat16)
    w_p = w_proj.astype(jnp.bfloat16)
    b_p = b_proj.reshape(1, C).astype(jnp.float32)
    x_bf = x.astype(jnp.bfloat16)

    kernel = functools.partial(_attention_kernel, num_heads=num_heads)

    return pl.pallas_call(
        kernel,
        out_shape=jax.ShapeDtypeStruct((B, N, C), x.dtype),
        grid_spec=pltpu.PrefetchScalarGridSpec(
            num_scalar_prefetch=0,
            grid=(B,),
            in_specs=[
                pl.BlockSpec((1, N, C), lambda b: (b, 0, 0)),   # x
                pl.BlockSpec((C, C), lambda b: (0, 0)),         # w_q (pre-scaled)
                pl.BlockSpec((C, C), lambda b: (0, 0)),         # w_k
                pl.BlockSpec((C, C), lambda b: (0, 0)),         # w_v
                pl.BlockSpec((C, C), lambda b: (0, 0)),         # w_proj
                pl.BlockSpec((1, C), lambda b: (0, 0)),         # b_proj
            ],
            out_specs=pl.BlockSpec((1, N, C), lambda b: (b, 0, 0)),
            scratch_shapes=[
                pltpu.VMEM((N, C), jnp.bfloat16),   # q
                pltpu.VMEM((N, C), jnp.bfloat16),   # k
                pltpu.VMEM((N, C), jnp.bfloat16),   # v
                pltpu.VMEM((N, C), jnp.bfloat16),   # ctx
            ],
        ),
        compiler_params=pltpu.CompilerParams(
            dimension_semantics=("parallel",),
            vmem_limit_bytes=48 * 1024 * 1024,
        ),
    )(x_bf, w_q, w_k, w_v, w_p, b_p)


def attention_ref(x, w_qkv, w_proj, b_proj, *, num_heads):
    """Pure-JAX f32 reference mirroring the PyTorch forward."""
    B, N, C = x.shape
    hd = C // num_heads
    scale = hd ** (-0.5)
    qkv = x @ w_qkv                                            # (B, N, 3C)
    qkv = qkv.reshape(B, N, 3, num_heads, hd).transpose(2, 0, 3, 1, 4)
    q, k, v = qkv[0], qkv[1], qkv[2]                           # (B, H, N, hd)
    attn = (q @ jnp.swapaxes(k, -2, -1)) * scale               # (B, H, N, N)
    attn = jax.nn.softmax(attn, axis=-1)
    out = (attn @ v).transpose(0, 2, 1, 3).reshape(B, N, C)
    return out @ w_proj + b_proj


if __name__ == "__main__":
    B, N, C = 2, 8, 32
    num_heads = 8

    key = jax.random.PRNGKey(0)
    kx, kq, kp, kb = jax.random.split(key, 4)

    x = jax.random.normal(kx, (B, N, C), dtype=jnp.float32)
    # Deterministic "Linear" parameters in (in, out) layout; qkv_bias=False.
    w_qkv = jax.random.normal(kq, (C, 3 * C), dtype=jnp.float32) * 0.05
    w_proj = jax.random.normal(kp, (C, C), dtype=jnp.float32) * 0.05
    b_proj = jax.random.normal(kb, (C,), dtype=jnp.float32) * 0.05

    out = attention_pallas(x, w_qkv, w_proj, b_proj, num_heads=num_heads)
    out = jax.block_until_ready(out)

    ref = attention_ref(x, w_qkv, w_proj, b_proj, num_heads=num_heads)
    assert out.shape == (B, N, C)
    # bf16 matmul operands + approx reciprocal => ~1e-2-level relative error
    # vs the f32 reference; tolerance loosened accordingly.
    assert jnp.allclose(out, ref, atol=2e-2, rtol=2e-2), "mismatch vs reference"

    print("KERNEL_OK")
</pallas_src>

<mosaic_0001>
module attributes {stable_mosaic.version = 11 : i64} {
  func.func @_attention_kernel(%arg0: i32, %arg1: memref<1x8x32xbf16, #tpu.memory_space<vmem>>, %arg2: memref<32x32xbf16, #tpu.memory_space<vmem>>, %arg3: memref<32x32xbf16, #tpu.memory_space<vmem>>, %arg4: memref<32x32xbf16, #tpu.memory_space<vmem>>, %arg5: memref<32x32xbf16, #tpu.memory_space<vmem>>, %arg6: memref<1x32xf32, #tpu.memory_space<vmem>>, %arg7: memref<1x8x32xf32, #tpu.memory_space<vmem>>, %arg8: memref<8x32xbf16, #tpu.memory_space<vmem>>, %arg9: memref<8x32xbf16, #tpu.memory_space<vmem>>, %arg10: memref<8x32xbf16, #tpu.memory_space<vmem>>, %arg11: memref<8x32xbf16, #tpu.memory_space<vmem>>) attributes {dimension_semantics = [#tpu.dimension_semantics<parallel>], iteration_bounds = array<i64: 2>, scalar_prefetch = 0 : i64, scratch_operands = 4 : i64, tpu.core_type = #tpu.core_type<tc>, window_params = [{transform_indices = @transform_0, window_bounds = array<i64: 1, 8, 32>}, {pipeline_mode = #tpu.pipeline_mode<synchronous>, transform_indices = @transform_1, window_bounds = array<i64: 32, 32>}, {pipeline_mode = #tpu.pipeline_mode<synchronous>, transform_indices = @transform_2, window_bounds = array<i64: 32, 32>}, {pipeline_mode = #tpu.pipeline_mode<synchronous>, transform_indices = @transform_3, window_bounds = array<i64: 32, 32>}, {pipeline_mode = #tpu.pipeline_mode<synchronous>, transform_indices = @transform_4, window_bounds = array<i64: 32, 32>}, {pipeline_mode = #tpu.pipeline_mode<synchronous>, transform_indices = @transform_5, window_bounds = array<i64: 1, 32>}, {transform_indices = @transform_6, window_bounds = array<i64: 1, 8, 32>}]} {
    %c0 = arith.constant 0 : index
    %c0_0 = arith.constant 0 : index
    %c0_1 = arith.constant 0 : index
    %0 = vector.load %arg1[%c0, %c0_0, %c0_1] : memref<1x8x32xbf16, #tpu.memory_space<vmem>>, vector<1x8x32xbf16>
    %1 = vector.shape_cast %0 : vector<1x8x32xbf16> to vector<8x32xbf16>
    %c0_2 = arith.constant 0 : index
    %c0_3 = arith.constant 0 : index
    %2 = vector.load %arg2[%c0_2, %c0_3] : memref<32x32xbf16, #tpu.memory_space<vmem>>, vector<32x32xbf16>
    %cst = arith.constant dense<0.000000e+00> : vector<8x32xf32>
    %3 = tpu.matmul %1, %2, %cst {dimension_numbers = #tpu.dot_dimension_numbers<[1], [0], [0], [1], [0, 0, 1, 1], [], []>} : vector<8x32xbf16>, vector<32x32xbf16>, vector<8x32xf32> -> vector<8x32xf32>
    %4 = arith.truncf %3 : vector<8x32xf32> to vector<8x32xbf16>
    %c0_4 = arith.constant 0 : index
    %c0_5 = arith.constant 0 : index
    %5 = vector.load %arg8[%c0_4, %c0_5] : memref<8x32xbf16, #tpu.memory_space<vmem>>, vector<8x32xbf16>
    tpu.vector_store %arg8[%c0_4, %c0_5], %4 {strides = array<i32>} : memref<8x32xbf16, #tpu.memory_space<vmem>>, vector<8x32xbf16>,
    %c0_6 = arith.constant 0 : index
    %c0_7 = arith.constant 0 : index
    %6 = vector.load %arg3[%c0_6, %c0_7] : memref<32x32xbf16, #tpu.memory_space<vmem>>, vector<32x32xbf16>
    %cst_8 = arith.constant dense<0.000000e+00> : vector<8x32xf32>
    %7 = tpu.matmul %1, %6, %cst_8 {dimension_numbers = #tpu.dot_dimension_numbers<[1], [0], [0], [1], [0, 0, 1, 1], [], []>} : vector<8x32xbf16>, vector<32x32xbf16>, vector<8x32xf32> -> vector<8x32xf32>
    %8 = arith.truncf %7 : vector<8x32xf32> to vector<8x32xbf16>
    %c0_9 = arith.constant 0 : index
    %c0_10 = arith.constant 0 : index
    %9 = vector.load %arg9[%c0_9, %c0_10] : memref<8x32xbf16, #tpu.memory_space<vmem>>, vector<8x32xbf16>
    tpu.vector_store %arg9[%c0_9, %c0_10], %8 {strides = array<i32>} : memref<8x32xbf16, #tpu.memory_space<vmem>>, vector<8x32xbf16>,
    %c0_11 = arith.constant 0 : index
    %c0_12 = arith.constant 0 : index
    %10 = vector.load %arg4[%c0_11, %c0_12] : memref<32x32xbf16, #tpu.memory_space<vmem>>, vector<32x32xbf16>
    %cst_13 = arith.constant dense<0.000000e+00> : vector<8x32xf32>
    %11 = tpu.matmul %1, %10, %cst_13 {dimension_numbers = #tpu.dot_dimension_numbers<[1], [0], [0], [1], [0, 0, 1, 1], [], []>} : vector<8x32xbf16>, vector<32x32xbf16>, vector<8x32xf32> -> vector<8x32xf32>
    %12 = arith.truncf %11 : vector<8x32xf32> to vector<8x32xbf16>
    %c0_14 = arith.constant 0 : index
    %c0_15 = arith.constant 0 : index
    %13 = vector.load %arg10[%c0_14, %c0_15] : memref<8x32xbf16, #tpu.memory_space<vmem>>, vector<8x32xbf16>
    tpu.vector_store %arg10[%c0_14, %c0_15], %12 {strides = array<i32>} : memref<8x32xbf16, #tpu.memory_space<vmem>>, vector<8x32xbf16>,
    %c0_16 = arith.constant 0 : index
    %c0_17 = arith.constant 0 : index
    %14 = vector.load %arg8[%c0_16, %c0_17] : memref<8x32xbf16, #tpu.memory_space<vmem>>, vector<8x4xbf16>
    %c0_18 = arith.constant 0 : index
    %c0_19 = arith.constant 0 : index
    %15 = vector.load %arg9[%c0_18, %c0_19] : memref<8x32xbf16, #tpu.memory_space<vmem>>, vector<8x4xbf16>
    %c0_20 = arith.constant 0 : index
    %c0_21 = arith.constant 0 : index
    %16 = vector.load %arg10[%c0_20, %c0_21] : memref<8x32xbf16, #tpu.memory_space<vmem>>, vector<8x4xbf16>
    %cst_22 = arith.constant dense<0.000000e+00> : vector<8x8xf32>
    %17 = tpu.matmul %14, %15, %cst_22 {dimension_numbers = #tpu.dot_dimension_numbers<[1], [1], [0], [0], [0, 0, 1, 0], [], []>} : vector<8x4xbf16>, vector<8x4xbf16>, vector<8x8xf32> -> vector<8x8xf32>
    %cst_23 = arith.constant dense<0xFF800000> : vector<8xf32>
    %18 = vector.multi_reduction <maximumf>, %17, %cst_23 [1] : vector<8x8xf32> to vector<8xf32>
    %19 = vector.shape_cast %18 : vector<8xf32> to vector<8x1xf32>
    %20 = vector.broadcast %19 : vector<8x1xf32> to vector<8x8xf32>
    %21 = arith.subf %17, %20 : vector<8x8xf32>
    %22 = math.exp %21 : vector<8x8xf32>
    %cst_24 = arith.constant dense<0.000000e+00> : vector<8xf32>
    %23 = vector.multi_reduction <add>, %22, %cst_24 [1] : vector<8x8xf32> to vector<8xf32>
    %24 = vector.shape_cast %23 : vector<8xf32> to vector<8x1xf32>
    %25 = tpu.reciprocal %24 {approx = true} : vector<8x1xf32> -> vector<8x1xf32>
    %26 = vector.broadcast %25 : vector<8x1xf32> to vector<8x8xf32>
    %27 = arith.mulf %22, %26 : vector<8x8xf32>
    %28 = arith.truncf %27 : vector<8x8xf32> to vector<8x8xbf16>
    %cst_25 = arith.constant dense<0.000000e+00> : vector<8x4xf32>
    %29 = tpu.matmul %28, %16, %cst_25 {dimension_numbers = #tpu.dot_dimension_numbers<[1], [0], [0], [1], [0, 0, 1, 1], [], []>} : vector<8x8xbf16>, vector<8x4xbf16>, vector<8x4xf32> -> vector<8x4xf32>
    %30 = arith.truncf %29 : vector<8x4xf32> to vector<8x4xbf16>
    %c0_26 = arith.constant 0 : index
    %c0_27 = arith.constant 0 : index
    %31 = vector.load %arg11[%c0_26, %c0_27] : memref<8x32xbf16, #tpu.memory_space<vmem>>, vector<8x4xbf16>
    tpu.vector_store %arg11[%c0_26, %c0_27], %30 {strides = array<i32>} : memref<8x32xbf16, #tpu.memory_space<vmem>>, vector<8x4xbf16>,
    %c0_28 = arith.constant 0 : index
    %c4 = arith.constant 4 : index
    %32 = vector.load %arg8[%c0_28, %c4] : memref<8x32xbf16, #tpu.memory_space<vmem>>, vector<8x4xbf16>
    %c0_29 = arith.constant 0 : index
    %c4_30 = arith.constant 4 : index
    %33 = vector.load %arg9[%c0_29, %c4_30] : memref<8x32xbf16, #tpu.memory_space<vmem>>, vector<8x4xbf16>
    %c0_31 = arith.constant 0 : index
    %c4_32 = arith.constant 4 : index
    %34 = vector.load %arg10[%c0_31, %c4_32] : memref<8x32xbf16, #tpu.memory_space<vmem>>, vector<8x4xbf16>
    %cst_33 = arith.constant dense<0.000000e+00> : vector<8x8xf32>
    %35 = tpu.matmul %32, %33, %cst_33 {dimension_numbers = #tpu.dot_dimension_numbers<[1], [1], [0], [0], [0, 0, 1, 0], [], []>} : vector<8x4xbf16>, vector<8x4xbf16>, vector<8x8xf32> -> vector<8x8xf32>
    %cst_34 = arith.constant dense<0xFF800000> : vector<8xf32>
    %36 = vector.multi_reduction <maximumf>, %35, %cst_34 [1] : vector<8x8xf32> to vector<8xf32>
    %37 = vector.shape_cast %36 : vector<8xf32> to vector<8x1xf32>
    %38 = vector.broadcast %37 : vector<8x1xf32> to vector<8x8xf32>
    %39 = arith.subf %35, %38 : vector<8x8xf32>
    %40 = math.exp %39 : vector<8x8xf32>
    %cst_35 = arith.constant dense<0.000000e+00> : vector<8xf32>
    %41 = vector.multi_reduction <add>, %40, %cst_35 [1] : vector<8x8xf32> to vector<8xf32>
    %42 = vector.shape_cast %41 : vector<8xf32> to vector<8x1xf32>
    %43 = tpu.reciprocal %42 {approx = true} : vector<8x1xf32> -> vector<8x1xf32>
    %44 = vector.broadcast %43 : vector<8x1xf32> to vector<8x8xf32>
    %45 = arith.mulf %40, %44 : vector<8x8xf32>
    %46 = arith.truncf %45 : vector<8x8xf32> to vector<8x8xbf16>
    %cst_36 = arith.constant dense<0.000000e+00> : vector<8x4xf32>
    %47 = tpu.matmul %46, %34, %cst_36 {dimension_numbers = #tpu.dot_dimension_numbers<[1], [0], [0], [1], [0, 0, 1, 1], [], []>} : vector<8x8xbf16>, vector<8x4xbf16>, vector<8x4xf32> -> vector<8x4xf32>
    %48 = arith.truncf %47 : vector<8x4xf32> to vector<8x4xbf16>
    %c0_37 = arith.constant 0 : index
    %c4_38 = arith.constant 4 : index
    %49 = vector.load %arg11[%c0_37, %c4_38] : memref<8x32xbf16, #tpu.memory_space<vmem>>, vector<8x4xbf16>
    tpu.vector_store %arg11[%c0_37, %c4_38], %48 {strides = array<i32>} : memref<8x32xbf16, #tpu.memory_space<vmem>>, vector<8x4xbf16>,
    %c0_39 = arith.constant 0 : index
    %c8 = arith.constant 8 : index
    %50 = vector.load %arg8[%c0_39, %c8] : memref<8x32xbf16, #tpu.memory_space<vmem>>, vector<8x4xbf16>
    %c0_40 = arith.constant 0 : index
    %c8_41 = arith.constant 8 : index
    %51 = vector.load %arg9[%c0_40, %c8_41] : memref<8x32xbf16, #tpu.memory_space<vmem>>, vector<8x4xbf16>
    %c0_42 = arith.constant 0 : index
    %c8_43 = arith.constant 8 : index
    %52 = vector.load %arg10[%c0_42, %c8_43] : memref<8x32xbf16, #tpu.memory_space<vmem>>, vector<8x4xbf16>
    %cst_44 = arith.constant dense<0.000000e+00> : vector<8x8xf32>
    %53 = tpu.matmul %50, %51, %cst_44 {dimension_numbers = #tpu.dot_dimension_numbers<[1], [1], [0], [0], [0, 0, 1, 0], [], []>} : vector<8x4xbf16>, vector<8x4xbf16>, vector<8x8xf32> -> vector<8x8xf32>
    %cst_45 = arith.constant dense<0xFF800000> : vector<8xf32>
    %54 = vector.multi_reduction <maximumf>, %53, %cst_45 [1] : vector<8x8xf32> to vector<8xf32>
    %55 = vector.shape_cast %54 : vector<8xf32> to vector<8x1xf32>
    %56 = vector.broadcast %55 : vector<8x1xf32> to vector<8x8xf32>
    %57 = arith.subf %53, %56 : vector<8x8xf32>
    %58 = math.exp %57 : vector<8x8xf32>
    %cst_46 = arith.constant dense<0.000000e+00> : vector<8xf32>
    %59 = vector.multi_reduction <add>, %58, %cst_46 [1] : vector<8x8xf32> to vector<8xf32>
    %60 = vector.shape_cast %59 : vector<8xf32> to vector<8x1xf32>
    %61 = tpu.reciprocal %60 {approx = true} : vector<8x1xf32> -> vector<8x1xf32>
    %62 = vector.broadcast %61 : vector<8x1xf32> to vector<8x8xf32>
    %63 = arith.mulf %58, %62 : vector<8x8xf32>
    %64 = arith.truncf %63 : vector<8x8xf32> to vector<8x8xbf16>
    %cst_47 = arith.constant dense<0.000000e+00> : vector<8x4xf32>
    %65 = tpu.matmul %64, %52, %cst_47 {dimension_numbers = #tpu.dot_dimension_numbers<[1], [0], [0], [1], [0, 0, 1, 1], [], []>} : vector<8x8xbf16>, vector<8x4xbf16>, vector<8x4xf32> -> vector<8x4xf32>
    %66 = arith.truncf %65 : vector<8x4xf32> to vector<8x4xbf16>
    %c0_48 = arith.constant 0 : index
    %c8_49 = arith.constant 8 : index
    %67 = vector.load %arg11[%c0_48, %c8_49] : memref<8x32xbf16, #tpu.memory_space<vmem>>, vector<8x4xbf16>
    tpu.vector_store %arg11[%c0_48, %c8_49], %66 {strides = array<i32>} : memref<8x32xbf16, #tpu.memory_space<vmem>>, vector<8x4xbf16>,
    %c0_50 = arith.constant 0 : index
    %c12 = arith.constant 12 : index
    %68 = vector.load %arg8[%c0_50, %c12] : memref<8x32xbf16, #tpu.memory_space<vmem>>, vector<8x4xbf16>
    %c0_51 = arith.constant 0 : index
    %c12_52 = arith.constant 12 : index
    %69 = vector.load %arg9[%c0_51, %c12_52] : memref<8x32xbf16, #tpu.memory_space<vmem>>, vector<8x4xbf16>
    %c0_53 = arith.constant 0 : index
    %c12_54 = arith.constant 12 : index
    %70 = vector.load %arg10[%c0_53, %c12_54] : memref<8x32xbf16, #tpu.memory_space<vmem>>, vector<8x4xbf16>
    %cst_55 = arith.constant dense<0.000000e+00> : vector<8x8xf32>
    %71 = tpu.matmul %68, %69, %cst_55 {dimension_numbers = #tpu.dot_dimension_numbers<[1], [1], [0], [0], [0, 0, 1, 0], [], []>} : vector<8x4xbf16>, vector<8x4xbf16>, vector<8x8xf32> -> vector<8x8xf32>
    %cst_56 = arith.constant dense<0xFF800000> : vector<8xf32>
    %72 = vector.multi_reduction <maximumf>, %71, %cst_56 [1] : vector<8x8xf32> to vector<8xf32>
    %73 = vector.shape_cast %72 : vector<8xf32> to vector<8x1xf32>
    %74 = vector.broadcast %73 : vector<8x1xf32> to vector<8x8xf32>
    %75 = arith.subf %71, %74 : vector<8x8xf32>
    %76 = math.exp %75 : vector<8x8xf32>
    %cst_57 = arith.constant dense<0.000000e+00> : vector<8xf32>
    %77 = vector.multi_reduction <add>, %76, %cst_57 [1] : vector<8x8xf32> to vector<8xf32>
    %78 = vector.shape_cast %77 : vector<8xf32> to vector<8x1xf32>
    %79 = tpu.reciprocal %78 {approx = true} : vector<8x1xf32> -> vector<8x1xf32>
    %80 = vector.broadcast %79 : vector<8x1xf32> to vector<8x8xf32>
    %81 = arith.mulf %76, %80 : vector<8x8xf32>
    %82 = arith.truncf %81 : vector<8x8xf32> to vector<8x8xbf16>
    %cst_58 = arith.constant dense<0.000000e+00> : vector<8x4xf32>
    %83 = tpu.matmul %82, %70, %cst_58 {dimension_numbers = #tpu.dot_dimension_numbers<[1], [0], [0], [1], [0, 0, 1, 1], [], []>} : vector<8x8xbf16>, vector<8x4xbf16>, vector<8x4xf32> -> vector<8x4xf32>
    %84 = arith.truncf %83 : vector<8x4xf32> to vector<8x4xbf16>
    %c0_59 = arith.constant 0 : index
    %c12_60 = arith.constant 12 : index
    %85 = vector.load %arg11[%c0_59, %c12_60] : memref<8x32xbf16, #tpu.memory_space<vmem>>, vector<8x4xbf16>
    tpu.vector_store %arg11[%c0_59, %c12_60], %84 {strides = array<i32>} : memref<8x32xbf16, #tpu.memory_space<vmem>>, vector<8x4xbf16>,
    %c0_61 = arith.constant 0 : index
    %c16 = arith.constant 16 : index
    %86 = vector.load %arg8[%c0_61, %c16] : memref<8x32xbf16, #tpu.memory_space<vmem>>, vector<8x4xbf16>
    %c0_62 = arith.constant 0 : index
    %c16_63 = arith.constant 16 : index
    %87 = vector.load %arg9[%c0_62, %c16_63] : memref<8x32xbf16, #tpu.memory_space<vmem>>, vector<8x4xbf16>
    %c0_64 = arith.constant 0 : index
    %c16_65 = arith.constant 16 : index
    %88 = vector.load %arg10[%c0_64, %c16_65] : memref<8x32xbf16, #tpu.memory_space<vmem>>, vector<8x4xbf16>
    %cst_66 = arith.constant dense<0.000000e+00> : vector<8x8xf32>
    %89 = tpu.matmul %86, %87, %cst_66 {dimension_numbers = #tpu.dot_dimension_numbers<[1], [1], [0], [0], [0, 0, 1, 0], [], []>} : vector<8x4xbf16>, vector<8x4xbf16>, vector<8x8xf32> -> vector<8x8xf32>
    %cst_67 = arith.constant dense<0xFF800000> : vector<8xf32>
    %90 = vector.multi_reduction <maximumf>, %89, %cst_67 [1] : vector<8x8xf32> to vector<8xf32>
    %91 = vector.shape_cast %90 : vector<8xf32> to vector<8x1xf32>
    %92 = vector.broadcast %91 : vector<8x1xf32> to vector<8x8xf32>
    %93 = arith.subf %89, %92 : vector<8x8xf32>
    %94 = math.exp %93 : vector<8x8xf32>
    %cst_68 = arith.constant dense<0.000000e+00> : vector<8xf32>
    %95 = vector.multi_reduction <add>, %94, %cst_68 [1] : vector<8x8xf32> to vector<8xf32>
    %96 = vector.shape_cast %95 : vector<8xf32> to vector<8x1xf32>
    %97 = tpu.reciprocal %96 {approx = true} : vector<8x1xf32> -> vector<8x1xf32>
    %98 = vector.broadcast %97 : vector<8x1xf32> to vector<8x8xf32>
    %99 = arith.mulf %94, %98 : vector<8x8xf32>
    %100 = arith.truncf %99 : vector<8x8xf32> to vector<8x8xbf16>
    %cst_69 = arith.constant dense<0.000000e+00> : vector<8x4xf32>
    %101 = tpu.matmul %100, %88, %cst_69 {dimension_numbers = #tpu.dot_dimension_numbers<[1], [0], [0], [1], [0, 0, 1, 1], [], []>} : vector<8x8xbf16>, vector<8x4xbf16>, vector<8x4xf32> -> vector<8x4xf32>
    %102 = arith.truncf %101 : vector<8x4xf32> to vector<8x4xbf16>
    %c0_70 = arith.constant 0 : index
    %c16_71 = arith.constant 16 : index
    %103 = vector.load %arg11[%c0_70, %c16_71] : memref<8x32xbf16, #tpu.memory_space<vmem>>, vector<8x4xbf16>
    tpu.vector_store %arg11[%c0_70, %c16_71], %102 {strides = array<i32>} : memref<8x32xbf16, #tpu.memory_space<vmem>>, vector<8x4xbf16>,
    %c0_72 = arith.constant 0 : index
    %c20 = arith.constant 20 : index
    %104 = vector.load %arg8[%c0_72, %c20] : memref<8x32xbf16, #tpu.memory_space<vmem>>, vector<8x4xbf16>
    %c0_73 = arith.constant 0 : index
    %c20_74 = arith.constant 20 : index
    %105 = vector.load %arg9[%c0_73, %c20_74] : memref<8x32xbf16, #tpu.memory_space<vmem>>, vector<8x4xbf16>
    %c0_75 = arith.constant 0 : index
    %c20_76 = arith.constant 20 : index
    %106 = vector.load %arg10[%c0_75, %c20_76] : memref<8x32xbf16, #tpu.memory_space<vmem>>, vector<8x4xbf16>
    %cst_77 = arith.constant dense<0.000000e+00> : vector<8x8xf32>
    %107 = tpu.matmul %104, %105, %cst_77 {dimension_numbers = #tpu.dot_dimension_numbers<[1], [1], [0], [0], [0, 0, 1, 0], [], []>} : vector<8x4xbf16>, vector<8x4xbf16>, vector<8x8xf32> -> vector<8x8xf32>
    %cst_78 = arith.constant dense<0xFF800000> : vector<8xf32>
    %108 = vector.multi_reduction <maximumf>, %107, %cst_78 [1] : vector<8x8xf32> to vector<8xf32>
    %109 = vector.shape_cast %108 : vector<8xf32> to vector<8x1xf32>
    %110 = vector.broadcast %109 : vector<8x1xf32> to vector<8x8xf32>
    %111 = arith.subf %107, %110 : vector<8x8xf32>
    %112 = math.exp %111 : vector<8x8xf32>
    %cst_79 = arith.constant dense<0.000000e+00> : vector<8xf32>
    %113 = vector.multi_reduction <add>, %112, %cst_79 [1] : vector<8x8xf32> to vector<8xf32>
    %114 = vector.shape_cast %113 : vector<8xf32> to vector<8x1xf32>
    %115 = tpu.reciprocal %114 {approx = true} : vector<8x1xf32> -> vector<8x1xf32>
    %116 = vector.broadcast %115 : vector<8x1xf32> to vector<8x8xf32>
    %117 = arith.mulf %112, %116 : vector<8x8xf32>
    %118 = arith.truncf %117 : vector<8x8xf32> to vector<8x8xbf16>
    %cst_80 = arith.constant dense<0.000000e+00> : vector<8x4xf32>
    %119 = tpu.matmul %118, %106, %cst_80 {dimension_numbers = #tpu.dot_dimension_numbers<[1], [0], [0], [1], [0, 0, 1, 1], [], []>} : vector<8x8xbf16>, vector<8x4xbf16>, vector<8x4xf32> -> vector<8x4xf32>
    %120 = arith.truncf %119 : vector<8x4xf32> to vector<8x4xbf16>
    %c0_81 = arith.constant 0 : index
    %c20_82 = arith.constant 20 : index
    %121 = vector.load %arg11[%c0_81, %c20_82] : memref<8x32xbf16, #tpu.memory_space<vmem>>, vector<8x4xbf16>
    tpu.vector_store %arg11[%c0_81, %c20_82], %120 {strides = array<i32>} : memref<8x32xbf16, #tpu.memory_space<vmem>>, vector<8x4xbf16>,
    %c0_83 = arith.constant 0 : index
    %c24 = arith.constant 24 : index
    %122 = vector.load %arg8[%c0_83, %c24] : memref<8x32xbf16, #tpu.memory_space<vmem>>, vector<8x4xbf16>
    %c0_84 = arith.constant 0 : index
    %c24_85 = arith.constant 24 : index
    %123 = vector.load %arg9[%c0_84, %c24_85] : memref<8x32xbf16, #tpu.memory_space<vmem>>, vector<8x4xbf16>
    %c0_86 = arith.constant 0 : index
    %c24_87 = arith.constant 24 : index
    %124 = vector.load %arg10[%c0_86, %c24_87] : memref<8x32xbf16, #tpu.memory_space<vmem>>, vector<8x4xbf16>
    %cst_88 = arith.constant dense<0.000000e+00> : vector<8x8xf32>
    %125 = tpu.matmul %122, %123, %cst_88 {dimension_numbers = #tpu.dot_dimension_numbers<[1], [1], [0], [0], [0, 0, 1, 0], [], []>} : vector<8x4xbf16>, vector<8x4xbf16>, vector<8x8xf32> -> vector<8x8xf32>
    %cst_89 = arith.constant dense<0xFF800000> : vector<8xf32>
    %126 = vector.multi_reduction <maximumf>, %125, %cst_89 [1] : vector<8x8xf32> to vector<8xf32>
    %127 = vector.shape_cast %126 : vector<8xf32> to vector<8x1xf32>
    %128 = vector.broadcast %127 : vector<8x1xf32> to vector<8x8xf32>
    %129 = arith.subf %125, %128 : vector<8x8xf32>
    %130 = math.exp %129 : vector<8x8xf32>
    %cst_90 = arith.constant dense<0.000000e+00> : vector<8xf32>
    %131 = vector.multi_reduction <add>, %130, %cst_90 [1] : vector<8x8xf32> to vector<8xf32>
    %132 = vector.shape_cast %131 : vector<8xf32> to vector<8x1xf32>
    %133 = tpu.reciprocal %132 {approx = true} : vector<8x1xf32> -> vector<8x1xf32>
    %134 = vector.broadcast %133 : vector<8x1xf32> to vector<8x8xf32>
    %135 = arith.mulf %130, %134 : vector<8x8xf32>
    %136 = arith.truncf %135 : vector<8x8xf32> to vector<8x8xbf16>
    %cst_91 = arith.constant dense<0.000000e+00> : vector<8x4xf32>
    %137 = tpu.matmul %136, %124, %cst_91 {dimension_numbers = #tpu.dot_dimension_numbers<[1], [0], [0], [1], [0, 0, 1, 1], [], []>} : vector<8x8xbf16>, vector<8x4xbf16>, vector<8x4xf32> -> vector<8x4xf32>
    %138 = arith.truncf %137 : vector<8x4xf32> to vector<8x4xbf16>
    %c0_92 = arith.constant 0 : index
    %c24_93 = arith.constant 24 : index
    %139 = vector.load %arg11[%c0_92, %c24_93] : memref<8x32xbf16, #tpu.memory_space<vmem>>, vector<8x4xbf16>
    tpu.vector_store %arg11[%c0_92, %c24_93], %138 {strides = array<i32>} : memref<8x32xbf16, #tpu.memory_space<vmem>>, vector<8x4xbf16>,
    %c0_94 = arith.constant 0 : index
    %c28 = arith.constant 28 : index
    %140 = vector.load %arg8[%c0_94, %c28] : memref<8x32xbf16, #tpu.memory_space<vmem>>, vector<8x4xbf16>
    %c0_95 = arith.constant 0 : index
    %c28_96 = arith.constant 28 : index
    %141 = vector.load %arg9[%c0_95, %c28_96] : memref<8x32xbf16, #tpu.memory_space<vmem>>, vector<8x4xbf16>
    %c0_97 = arith.constant 0 : index
    %c28_98 = arith.constant 28 : index
    %142 = vector.load %arg10[%c0_97, %c28_98] : memref<8x32xbf16, #tpu.memory_space<vmem>>, vector<8x4xbf16>
    %cst_99 = arith.constant dense<0.000000e+00> : vector<8x8xf32>
    %143 = tpu.matmul %140, %141, %cst_99 {dimension_numbers = #tpu.dot_dimension_numbers<[1], [1], [0], [0], [0, 0, 1, 0], [], []>} : vector<8x4xbf16>, vector<8x4xbf16>, vector<8x8xf32> -> vector<8x8xf32>
    %cst_100 = arith.constant dense<0xFF800000> : vector<8xf32>
    %144 = vector.multi_reduction <maximumf>, %143, %cst_100 [1] : vector<8x8xf32> to vector<8xf32>
    %145 = vector.shape_cast %144 : vector<8xf32> to vector<8x1xf32>
    %146 = vector.broadcast %145 : vector<8x1xf32> to vector<8x8xf32>
    %147 = arith.subf %143, %146 : vector<8x8xf32>
    %148 = math.exp %147 : vector<8x8xf32>
    %cst_101 = arith.constant dense<0.000000e+00> : vector<8xf32>
    %149 = vector.multi_reduction <add>, %148, %cst_101 [1] : vector<8x8xf32> to vector<8xf32>
    %150 = vector.shape_cast %149 : vector<8xf32> to vector<8x1xf32>
    %151 = tpu.reciprocal %150 {approx = true} : vector<8x1xf32> -> vector<8x1xf32>
    %152 = vector.broadcast %151 : vector<8x1xf32> to vector<8x8xf32>
    %153 = arith.mulf %148, %152 : vector<8x8xf32>
    %154 = arith.truncf %153 : vector<8x8xf32> to vector<8x8xbf16>
    %cst_102 = arith.constant dense<0.000000e+00> : vector<8x4xf32>
    %155 = tpu.matmul %154, %142, %cst_102 {dimension_numbers = #tpu.dot_dimension_numbers<[1], [0], [0], [1], [0, 0, 1, 1], [], []>} : vector<8x8xbf16>, vector<8x4xbf16>, vector<8x4xf32> -> vector<8x4xf32>
    %156 = arith.truncf %155 : vector<8x4xf32> to vector<8x4xbf16>
    %c0_103 = arith.constant 0 : index
    %c28_104 = arith.constant 28 : index
    %157 = vector.load %arg11[%c0_103, %c28_104] : memref<8x32xbf16, #tpu.memory_space<vmem>>, vector<8x4xbf16>
    tpu.vector_store %arg11[%c0_103, %c28_104], %156 {strides = array<i32>} : memref<8x32xbf16, #tpu.memory_space<vmem>>, vector<8x4xbf16>,
    %c0_105 = arith.constant 0 : index
    %c0_106 = arith.constant 0 : index
    %158 = vector.load %arg11[%c0_105, %c0_106] : memref<8x32xbf16, #tpu.memory_space<vmem>>, vector<8x32xbf16>
    %c0_107 = arith.constant 0 : index
    %c0_108 = arith.constant 0 : index
    %159 = vector.load %arg5[%c0_107, %c0_108] : memref<32x32xbf16, #tpu.memory_space<vmem>>, vector<32x32xbf16>
    %cst_109 = arith.constant dense<0.000000e+00> : vector<8x32xf32>
    %160 = tpu.matmul %158, %159, %cst_109 {dimension_numbers = #tpu.dot_dimension_numbers<[1], [0], [0], [1], [0, 0, 1, 1], [], []>} : vector<8x32xbf16>, vector<32x32xbf16>, vector<8x32xf32> -> vector<8x32xf32>
    %c0_110 = arith.constant 0 : index
    %c0_111 = arith.constant 0 : index
    %161 = vector.load %arg6[%c0_110, %c0_111] : memref<1x32xf32, #tpu.memory_space<vmem>>, vector<1x32xf32>
    %162 = vector.broadcast %161 : vector<1x32xf32> to vector<8x32xf32>
    %163 = arith.addf %160, %162 : vector<8x32xf32>
    %c0_112 = arith.constant 0 : index
    %c0_113 = arith.constant 0 : index
    %c0_114 = arith.constant 0 : index
    %164 = vector.load %arg7[%c0_112, %c0_113, %c0_114] : memref<1x8x32xf32, #tpu.memory_space<vmem>>, vector<1x8x32xf32>
    %165 = vector.shape_cast %164 : vector<1x8x32xf32> to vector<8x32xf32>
    %166 = vector.shape_cast %163 : vector<8x32xf32> to vector<1x8x32xf32>
    tpu.vector_store %arg7[%c0_112, %c0_113, %c0_114], %166 {strides = array<i32>} : memref<1x8x32xf32, #tpu.memory_space<vmem>>, vector<1x8x32xf32>,
    return
  }
  func.func @transform_0(%arg0: i32) -> (i32, i32, i32) {
    %c0_i32 = arith.constant 0 : i32
    %c0_i32_0 = arith.constant 0 : i32
    %c0_i32_1 = arith.constant 0 : i32
    return %arg0, %c0_i32, %c0_i32_0 : i32, i32, i32
  }
  func.func @transform_1(%arg0: i32) -> (i32, i32) {
    %c0_i32 = arith.constant 0 : i32
    %c0_i32_0 = arith.constant 0 : i32
    %c0_i32_1 = arith.constant 0 : i32
    return %c0_i32, %c0_i32_0 : i32, i32
  }
  func.func @transform_2(%arg0: i32) -> (i32, i32) {
    %c0_i32 = arith.constant 0 : i32
    %c0_i32_0 = arith.constant 0 : i32
    %c0_i32_1 = arith.constant 0 : i32
    return %c0_i32, %c0_i32_0 : i32, i32
  }
  func.func @transform_3(%arg0: i32) -> (i32, i32) {
    %c0_i32 = arith.constant 0 : i32
    %c0_i32_0 = arith.constant 0 : i32
    %c0_i32_1 = arith.constant 0 : i32
    return %c0_i32, %c0_i32_0 : i32, i32
  }
  func.func @transform_4(%arg0: i32) -> (i32, i32) {
    %c0_i32 = arith.constant 0 : i32
    %c0_i32_0 = arith.constant 0 : i32
    %c0_i32_1 = arith.constant 0 : i32
    return %c0_i32, %c0_i32_0 : i32, i32
  }
  func.func @transform_5(%arg0: i32) -> (i32, i32) {
    %c0_i32 = arith.constant 0 : i32
    %c0_i32_0 = arith.constant 0 : i32
    %c0_i32_1 = arith.constant 0 : i32
    return %c0_i32, %c0_i32_0 : i32, i32
  }
  func.func @transform_6(%arg0: i32) -> (i32, i32, i32) {
    %c0_i32 = arith.constant 0 : i32
    %c0_i32_0 = arith.constant 0 : i32
    %c0_i32_1 = arith.constant 0 : i32
    return %arg0, %c0_i32, %c0_i32_0 : i32, i32, i32
  }
}

</mosaic_0001>

<llo_original>
// kernel: tpu_custom_call.1
$region0: #{tpu_custom_call.1}
  #allocation0 [shape = 'u32[]', space=smem, size = 0x4, offset = 0x4, fixed_abs, tag = 'smem constant byte address 0x4 - core index']
  #allocation1 [shape = 'u32[144,128]{1,0:T(1,128)}', space=vmem, size = 0x12000, scoped, tag = 'internal scratch']
  #allocation2 [shape = 'bf16[8,32]{1,0:T(8,128)(2,1)}', space=vmem, size = 0x800, scoped, tag = 'scratch operand']
  #allocation3 [shape = 'bf16[8,32]{1,0:T(8,128)(2,1)}', space=vmem, size = 0x800, scoped, tag = 'scratch operand']
  #allocation4 [shape = 'bf16[8,32]{1,0:T(8,128)(2,1)}', space=vmem, size = 0x800, scoped, tag = 'scratch operand']
  #allocation5 [shape = 'bf16[8,32]{1,0:T(8,128)(2,1)}', space=vmem, size = 0x800, scoped, tag = 'scratch operand']
  %s0 = inlined_call_operand.hbm [shape: bf16[2,8,32], index: 0, kind: input, shape index: {}]
  %s1 = inlined_call_operand.hbm [shape: bf16[32,32], index: 1, kind: input, shape index: {}]
  %s2 = inlined_call_operand.hbm [shape: bf16[32,32], index: 2, kind: input, shape index: {}]
  %s3 = inlined_call_operand.hbm [shape: bf16[32,32], index: 3, kind: input, shape index: {}]
  %s4 = inlined_call_operand.hbm [shape: bf16[32,32], index: 4, kind: input, shape index: {}]
  %s5 = inlined_call_operand.vmem [shape: f32[1,32], index: 5, kind: input, shape index: {}]
  %s6 = inlined_call_operand.hbm [shape: f32[2,8,32], index: 6, kind: output, shape index: {}]
  %s7 = sld [smem:[#allocation0]]
  $region77: #{tpu_custom_call.1} parent=0
    _
  %s9 = ssub.s32 1, %s7
  %s10 = scalar_select 0, %s9, %s7
  $region1: #{tpu_custom_call.1} parent=0
    #allocation6 [shape = 'u8[4096]{0}', space=vmem, size = 0x1000, scoped, tag = 'input window, operand 0']
    #allocation7 [shape = 's32[2]{0}', space=sflag, size = 0x8, scoped, tag = 'scoped memory for tpu_custom_call.1']
    #allocation8 [shape = 's32[2]{0}', space=sflag, size = 0x8, scoped, tag = 'scoped memory for tpu_custom_call.1']
    #allocation9 [shape = 'u8[8192]{0}', space=vmem, size = 0x2000, scoped, tag = 'input window, operand 1, single buffered']
    #allocation10 [shape = 's32[1]{0}', space=sflag, size = 0x4, scoped, tag = 'scoped memory for tpu_custom_call.1']
    #allocation11 [shape = 'u8[8192]{0}', space=vmem, size = 0x2000, scoped, tag = 'input window, operand 2, single buffered']
    #allocation12 [shape = 'u8[8192]{0}', space=vmem, size = 0x2000, scoped, tag = 'input window, operand 3, single buffered']
    #allocation13 [shape = 's32[1]{0}', space=sflag, size = 0x4, scoped, tag = 'scoped memory for tpu_custom_call.1']
    #allocation14 [shape = 'u8[8192]{0}', space=vmem, size = 0x2000, scoped, tag = 'input window, operand 4, single buffered']
    #allocation15 [shape = 'u8[8192]{0}', space=vmem, size = 0x2000, scoped, tag = 'output window, operand 0']
    %11 = vsyncpa [#allocation7], 0
    %s12 = scalar_lea.sflag [#allocation7], 1
    %13 = vsyncpa %s12, 0
    %14 = vsyncpa [#allocation10], 0
    %15 = vsyncpa [#allocation13], 0
    %16 = vsyncpa [#allocation8], 0
    %s17 = scalar_lea.sflag [#allocation8], 1
    %18 = vsyncpa %s17, 0
    loop: start=0, step=1, limit=4
    $region2: #{tpu_custom_call.1} parent=1 // loop_pre_header
      _
    $region3: #{tpu_custom_call.1} parent=1 // loop_header
      %s20 = sphi 0, %s24
      %p21 = scmp.ge.s32.totalorder %s20, 4
      %s30 = sphi 0, %s32
      %s33 = sphi 0, %s30
      %s34 = sphi 0, %s33
      %s50 = sphi 0, %s34
      %s54 = sphi 0, %s54
      %s56 = sphi 0, %s54
      %s57 = sphi 0, %s56
      %s71 = sphi 0, %s57
      %s75 = sphi 0, %s75
      %s77 = sphi 0, %s75
      %s78 = sphi 0, %s77
      %s92 = sphi 0, %s78
      %s96 = sphi 0, %s96
      %s98 = sphi 0, %s96
      %s99 = sphi 0, %s98
      %s113 = sphi 0, %s99
      %s117 = sphi 0, %s117
      %s119 = sphi 0, %s117
      %s120 = sphi 0, %s119
      %s134 = sphi 0, %s120
      %s138 = sphi 0, %s138
      %s140 = sphi 0, %s138
      %s141 = sphi 0, %s140
      %s155 = sphi 0, %s141
      %s161 = sphi 0, %s163
      %s164 = sphi 0, %s161
      %s165 = sphi 0, %s164
      %s181 = sphi 0, %s165
    $region4: #{tpu_custom_call.1} parent=1 // loop_header_branch
      %23 = sbr.rel (%p21) target = $region8
    $region5: #{tpu_custom_call.1} parent=1 // loop_body
      %s25 = ssub.s32 %s20, 1
      %s26 = ssub.s32 %s20, 2
      %s27 = sadd.s32 %s20, 1
      %s28 = ssub.s32 %s20, %s27
      %p29 = scmp.eq.s32.totalorder %s28, 0
      %s31 = sadd.s32 %s30, 1
      %s32 = scalar_select %p29, %s30, %s31
      %p35 = pneg %p29
      %p36 = scmp.eq.s32.totalorder %s20, 1
      %p37 = por %p35, %p36
      %p38 = scmp.ne.s32.totalorder %s30, %s33
      %p39 = scmp.eq.s32.totalorder %s20, 0
      %p40 = por %p38, %p39
      %p41 = scmp.ne.s32.totalorder %s30, %s33
      %p42 = scmp.eq.s32.totalorder %s25, 1
      %p43 = por %p41, %p42
      %p44 = scmp.ne.s32.totalorder %s33, %s34
      %p45 = scmp.eq.s32.totalorder %s25, 0
      %p46 = por %p44, %p45
      %p47 = scmp.ne.s32.totalorder %s33, %s34
      %p48 = scmp.eq.s32.totalorder %s26, 1
      %p49 = por %p47, %p48
      %p51 = scmp.ne.s32.totalorder %s34, %s50
      %p52 = scmp.eq.s32.totalorder %s26, 0
      %p53 = por %p51, %p52
      %s55 = sadd.s32 %s54, 1
      %p58 = scmp.eq.s32.totalorder %s20, 1
      %p59 = scmp.ne.s32.totalorder %s54, %s56
      %p60 = scmp.eq.s32.totalorder %s20, 0
      %p61 = por %p59, %p60
      %p62 = scmp.ne.s32.totalorder %s54, %s56
      %p63 = scmp.eq.s32.totalorder %s25, 1
      %p64 = por %p62, %p63
      %p65 = scmp.ne.s32.totalorder %s56, %s57
      %p66 = scmp.eq.s32.totalorder %s25, 0
      %p67 = por %p65, %p66
      %p68 = scmp.ne.s32.totalorder %s56, %s57
      %p69 = scmp.eq.s32.totalorder %s26, 1
      %p70 = por %p68, %p69
      %p72 = scmp.ne.s32.totalorder %s57, %s71
      %p73 = scmp.eq.s32.totalorder %s26, 0
      %p74 = por %p72, %p73
      %s76 = sadd.s32 %s75, 1
      %p79 = scmp.eq.s32.totalorder %s20, 1
      %p80 = scmp.ne.s32.totalorder %s75, %s77
      %p81 = scmp.eq.s32.totalorder %s20, 0
      %p82 = por %p80, %p81
      %p83 = scmp.ne.s32.totalorder %s75, %s77
      %p84 = scmp.eq.s32.totalorder %s25, 1
      %p85 = por %p83, %p84
      %p86 = scmp.ne.s32.totalorder %s77, %s78
      %p87 = scmp.eq.s32.totalorder %s25, 0
      %p88 = por %p86, %p87
      %p89 = scmp.ne.s32.totalorder %s77, %s78
      %p90 = scmp.eq.s32.totalorder %s26, 1
      %p91 = por %p89, %p90
      %p93 = scmp.ne.s32.totalorder %s78, %s92
      %p94 = scmp.eq.s32.totalorder %s26, 0
      %p95 = por %p93, %p94
      %s97 = sadd.s32 %s96, 1
      %p100 = scmp.eq.s32.totalorder %s20, 1
      %p101 = scmp.ne.s32.totalorder %s96, %s98
      %p102 = scmp.eq.s32.totalorder %s20, 0
      %p103 = por %p101, %p102
      %p104 = scmp.ne.s32.totalorder %s96, %s98
      %p105 = scmp.eq.s32.totalorder %s25, 1
      %p106 = por %p104, %p105
      %p107 = scmp.ne.s32.totalorder %s98, %s99
      %p108 = scmp.eq.s32.totalorder %s25, 0
      %p109 = por %p107, %p108
      %p110 = scmp.ne.s32.totalorder %s98, %s99
      %p111 = scmp.eq.s32.totalorder %s26, 1
      %p112 = por %p110, %p111
      %p114 = scmp.ne.s32.totalorder %s99, %s113
      %p115 = scmp.eq.s32.totalorder %s26, 0
      %p116 = por %p114, %p115
      %s118 = sadd.s32 %s117, 1
      %p121 = scmp.eq.s32.totalorder %s20, 1
      %p122 = scmp.ne.s32.totalorder %s117, %s119
      %p123 = scmp.eq.s32.totalorder %s20, 0
      %p124 = por %p122, %p123
      %p125 = scmp.ne.s32.totalorder %s117, %s119
      %p126 = scmp.eq.s32.totalorder %s25, 1
      %p127 = por %p125, %p126
      %p128 = scmp.ne.s32.totalorder %s119, %s120
      %p129 = scmp.eq.s32.totalorder %s25, 0
      %p130 = por %p128, %p129
      %p131 = scmp.ne.s32.totalorder %s119, %s120
      %p132 = scmp.eq.s32.totalorder %s26, 1
      %p133 = por %p131, %p132
      %p135 = scmp.ne.s32.totalorder %s120, %s134
      %p136 = scmp.eq.s32.totalorder %s26, 0
      %p137 = por %p135, %p136
      %s139 = sadd.s32 %s138, 1
      %p142 = scmp.eq.s32.totalorder %s20, 1
      %p143 = scmp.ne.s32.totalorder %s138, %s140
      %p144 = scmp.eq.s32.totalorder %s20, 0
      %p145 = por %p143, %p144
      %p146 = scmp.ne.s32.totalorder %s138, %s140
      %p147 = scmp.eq.s32.totalorder %s25, 1
      %p148 = por %p146, %p147
      %p149 = scmp.ne.s32.totalorder %s140, %s141
      %p150 = scmp.eq.s32.totalorder %s25, 0
      %p151 = por %p149, %p150
      %p152 = scmp.ne.s32.totalorder %s140, %s141
      %p153 = scmp.eq.s32.totalorder %s26, 1
      %p154 = por %p152, %p153
      %p156 = scmp.ne.s32.totalorder %s141, %s155
      %p157 = scmp.eq.s32.totalorder %s26, 0
      %p158 = por %p156, %p157
      %s159 = ssub.s32 %s20, %s27
      %p160 = scmp.eq.s32.totalorder %s159, 0
      %s162 = sadd.s32 %s161, 1
      %s163 = scalar_select %p160, %s161, %s162
      %p166 = pneg %p160
      %p167 = scmp.eq.s32.totalorder %s20, 1
      %p168 = por %p166, %p167
      %p169 = scmp.ne.s32.totalorder %s161, %s164
      %p170 = scmp.eq.s32.totalorder %s20, 0
      %p171 = por %p169, %p170
      %p172 = scmp.ne.s32.totalorder %s161, %s164
      %p173 = scmp.eq.s32.totalorder %s25, 1
      %p174 = por %p172, %p173
      %p175 = scmp.ne.s32.totalorder %s164, %s165
      %p176 = scmp.eq.s32.totalorder %s25, 0
      %p177 = por %p175, %p176
      %p178 = scmp.ne.s32.totalorder %s164, %s165
      %p179 = scmp.eq.s32.totalorder %s26, 1
      %p180 = por %p178, %p179
      %p182 = scmp.ne.s32.totalorder %s165, %s181
      %p183 = scmp.eq.s32.totalorder %s26, 0
      %p184 = por %p182, %p183
      %p185 = scmp.le.s32.totalorder 1, %s20
      %p186 = scmp.lt.s32.totalorder %s20, 3
      %p187 = pnand %p185, %p186
      %p188 = pneg %p187
      // Predicated region
      $region9: #{tpu_custom_call.1} parent=5 // pred_check
        _
      $region10: #{tpu_custom_call.1} parent=5 // pred_check_branch
        %190 = sbr.rel (%p187) target = $region12
      $region11: #{tpu_custom_call.1} parent=5 // pred_region
        %s191 = ssub.s32 %s20, 1
        // Predicated region
        $region13: #{tpu_custom_call.1} parent=11 // pred_check
          %p192 = pneg %p67
        $region14: #{tpu_custom_call.1} parent=11 // pred_check_branch
          %194 = sbr.rel (%p192) target = $region16
        $region15: #{tpu_custom_call.1} parent=11 // pred_region
          %s196 = ssub.s32 256, 256
          %197 = vsyncadd [#allocation10], %s196
          %s198 = sshll.u32 [#allocation9], 4
          %s199 = int_to_ptr.vmem [resolvable:$true] %s198
          %204 = dma.hbm_to_vmem [thread:$0]  %s1, 256, %s199, [#allocation10], 64, 64, 4
        $region16: #{tpu_custom_call.1} parent=11 // pred_fallthru
          _
        // Predicated region
        $region17: #{tpu_custom_call.1} parent=11 // pred_check
          %p205 = pneg %p88
        $region18: #{tpu_custom_call.1} parent=11 // pred_check_branch
          %207 = sbr.rel (%p205) target = $region20
        $region19: #{tpu_custom_call.1} parent=11 // pred_region
          %s209 = ssub.s32 256, 256
          %210 = vsyncadd [#allocation10], %s209
          %s211 = sshll.u32 [#allocation11], 4
          %s212 = int_to_ptr.vmem [resolvable:$true] %s211
          %217 = dma.hbm_to_vmem [thread:$0]  %s2, 256, %s212, [#allocation10], 64, 64, 4
        $region20: #{tpu_custom_call.1} parent=11 // pred_fallthru
          _
        // Predicated region
        $region21: #{tpu_custom_call.1} parent=11 // pred_check
          %p218 = pneg %p109
        $region22: #{tpu_custom_call.1} parent=11 // pred_check_branch
          %220 = sbr.rel (%p218) target = $region24
        $region23: #{tpu_custom_call.1} parent=11 // pred_region
          %s222 = ssub.s32 256, 256
          %223 = vsyncadd [#allocation13], %s222
          %s224 = sshll.u32 [#allocation12], 4
          %s225 = int_to_ptr.vmem [resolvable:$true] %s224
          %230 = dma.hbm_to_vmem [thread:$0]  %s3, 256, %s225, [#allocation13], 64, 64, 4
        $region24: #{tpu_custom_call.1} parent=11 // pred_fallthru
          _
        // Predicated region
        $region25: #{tpu_custom_call.1} parent=11 // pred_check
          %p231 = pneg %p130
        $region26: #{tpu_custom_call.1} parent=11 // pred_check_branch
          %233 = sbr.rel (%p231) target = $region28
        $region27: #{tpu_custom_call.1} parent=11 // pred_region
          %s235 = ssub.s32 256, 256
          %236 = vsyncadd [#allocation13], %s235
          %s237 = sshll.u32 [#allocation14], 4
          %s238 = int_to_ptr.vmem [resolvable:$true] %s237
          %243 = dma.hbm_to_vmem [thread:$0]  %s4, 256, %s238, [#allocation13], 64, 64, 4
        $region28: #{tpu_custom_call.1} parent=11 // pred_fallthru
          _
        // Predicated region
        $region29: #{tpu_custom_call.1} parent=11 // pred_check
          %p244 = pneg %p151
        $region30: #{tpu_custom_call.1} parent=11 // pred_check_branch
          %246 = sbr.rel (%p244) target = $region32
        $region31: #{tpu_custom_call.1} parent=11 // pred_region
          _
        $region32: #{tpu_custom_call.1} parent=11 // pred_fallthru
          _
      $region12: #{tpu_custom_call.1} parent=5 // pred_fallthru
        _
      %p247 = scmp.lt.s32.totalorder %s20, 2
      // Predicated region
      $region33: #{tpu_custom_call.1} parent=5 // pred_check
        %p248 = pneg %p247
      $region34: #{tpu_custom_call.1} parent=5 // pred_check_branch
        %250 = sbr.rel (%p248) target = $region36
      $region35: #{tpu_custom_call.1} parent=5 // pred_region
        // Predicated region
        $region37: #{tpu_custom_call.1} parent=35 // pred_check
          %p251 = pneg %p40
        $region38: #{tpu_custom_call.1} parent=35 // pred_check_branch
          %253 = sbr.rel (%p251) target = $region40
        $region39: #{tpu_custom_call.1} parent=35 // pred_region
          %s254 = sand.u32 %s30, 1
          %s255 = scalar_lea.sflag [#allocation7], %s254
          %s256 = sand.u32 %s30, 1
          %s257 = smul.addr %s256, 4
          %s258 = scalar_lea.vmem [#allocation6], %s257
          %s260 = ssub.s32 64, 64
          %261 = vsyncadd %s255, %s260
          %s262 = smul.addr %s20, 64
          %s263 = scalar_lea.hbm %s0, %s262
          %s265 = sshll.u32 %s258, 4
          %s266 = int_to_ptr.vmem [resolvable:$true] %s265
          %268 = dma.hbm_to_vmem [thread:$0]  %s263, 64, %s266, %s255
        $region40: #{tpu_custom_call.1} parent=35 // pred_fallthru
          _
      $region36: #{tpu_custom_call.1} parent=5 // pred_fallthru
        _
      %p269 = scmp.le.s32.totalorder 1, %s20
      %p270 = scmp.lt.s32.totalorder %s20, 3
      %p271 = pnand %p269, %p270
      %p272 = pneg %p271
      // Predicated region
      $region41: #{tpu_custom_call.1} parent=5 // pred_check
        _
      $region42: #{tpu_custom_call.1} parent=5 // pred_check_branch
        %274 = sbr.rel (%p271) target = $region44
      $region43: #{tpu_custom_call.1} parent=5 // pred_region
        %s275 = ssub.s32 %s20, 1
        %s276 = sand.u32 %s33, 1
        %s277 = scalar_lea.sflag [#allocation7], %s276
        %s278 = sand.u32 %s33, 1
        %s279 = smul.addr %s278, 4
        %s280 = scalar_lea.vmem [#allocation6], %s279
        // Predicated region
        $region45: #{tpu_custom_call.1} parent=43 // pred_check
          %p281 = pneg %p46
        $region46: #{tpu_custom_call.1} parent=43 // pred_check_branch
          %283 = sbr.rel (%p281) target = $region48
        $region47: #{tpu_custom_call.1} parent=43 // pred_region
          %284 = dma.done %s277, 64
        $region48: #{tpu_custom_call.1} parent=43 // pred_fallthru
          _
        // Predicated region
        $region49: #{tpu_custom_call.1} parent=43 // pred_check
          %p285 = pneg %p67
        $region50: #{tpu_custom_call.1} parent=43 // pred_check_branch
          %287 = sbr.rel (%p285) target = $region52
        $region51: #{tpu_custom_call.1} parent=43 // pred_region
          %288 = dma.done [#allocation10], 256
        $region52: #{tpu_custom_call.1} parent=43 // pred_fallthru
          _
        // Predicated region
        $region53: #{tpu_custom_call.1} parent=43 // pred_check
          %p289 = pneg %p88
        $region54: #{tpu_custom_call.1} parent=43 // pred_check_branch
          %291 = sbr.rel (%p289) target = $region56
        $region55: #{tpu_custom_call.1} parent=43 // pred_region
          %292 = dma.done [#allocation10], 256
        $region56: #{tpu_custom_call.1} parent=43 // pred_fallthru
          _
        // Predicated region
        $region57: #{tpu_custom_call.1} parent=43 // pred_check
          %p293 = pneg %p109
        $region58: #{tpu_custom_call.1} parent=43 // pred_check_branch
          %295 = sbr.rel (%p293) target = $region60
        $region59: #{tpu_custom_call.1} parent=43 // pred_region
          %296 = dma.done [#allocation13], 256
        $region60: #{tpu_custom_call.1} parent=43 // pred_fallthru
          _
        // Predicated region
        $region61: #{tpu_custom_call.1} parent=43 // pred_check
          %p297 = pneg %p130
        $region62: #{tpu_custom_call.1} parent=43 // pred_check_branch
          %299 = sbr.rel (%p297) target = $region64
        $region63: #{tpu_custom_call.1} parent=43 // pred_region
          %300 = dma.done [#allocation13], 256
        $region64: #{tpu_custom_call.1} parent=43 // pred_fallthru
          _
        %s301 = sand.u32 %s33, 1
        %s302 = scalar_lea.sflag [#allocation7], %s301
        %s303 = sand.u32 %s33, 1
        %s304 = smul.addr %s303, 4
        %s305 = scalar_lea.vmem [#allocation6], %s304
        %p306 = pneg %p46
        %p307 = pneg %p43
        %p308 = pneg %p67
        %p309 = pneg %p64
        %p310 = pneg %p88
        %p311 = pneg %p85
        %p312 = pneg %p109
        %p313 = pneg %p106
        %p314 = pneg %p130
        %p315 = pneg %p127
        %p316 = pneg %p151
        %p317 = pneg %p148
        %p318 = pneg %p177
        %p319 = pneg %p174
        %s320 = sand.u32 %s164, 1
        %s321 = scalar_lea.sflag [#allocation8], %s320
        %s322 = sand.u32 %s164, 1
        %s323 = smul.addr %s322, 8
        %s324 = scalar_lea.vmem [#allocation15], %s323
        %v326 = vld [vmem:[%s280] sm:$0xf]
        %v327 = vld [vmem:[#allocation9] sm:$0xf]
        %v328 = vld [vmem:[#allocation9 + $0x4] sm:$0xf]
        %v329 = vld [vmem:[#allocation9 + $0x8] sm:$0xf]
        %v330 = vld [vmem:[#allocation9 + $0xc] sm:$0xf]
        %v335 = vunpack.c.l.b16 %v327
        %v336 = vunpack.c.l.b16 %v328
        %v337 = vunpack.c.l.b16 %v329
        %v338 = vunpack.c.l.b16 %v330
        %v339 = vpack.c.b16 %v336, %v335
        %v340 = vpack.c.b16 %v338, %v337
        %vm343 = vcmask 261120
        %v345 = vsel %vm343, %v326, 0
        %347 = vmatprep.subr.bf16.mxu0 0
        %348 = vmatpush1.bf16.msra.mxu0 %v339
        %349 = vmatprep.subr.bf16.mxu0 0
        %350 = vmatpush1.bf16.msra.mxu0 %v340
        %351 = vmatprep.subr.bf16.mxu0 0
        %352 = vmatpush1.bf16.msra.mxu0 0
        %353 = vmatprep.subr.bf16.mxu0 0
        %354 = vmatpush1.bf16.msra.mxu0 0
        %355 = vmatprep.subr.bf16.mxu0 0
        %356 = vmatpush1.bf16.msra.mxu0 0
        %357 = vmatprep.subr.bf16.mxu0 0
        %358 = vmatpush1.bf16.msra.mxu0 0
        %359 = vmatprep.subr.bf16.mxu0 0
        %360 = vmatpush1.bf16.msra.mxu0 0
        %361 = vmatprep.subr.bf16.mxu0 0
        %362 = vmatpush1.bf16.msra.mxu0 0
        %363 = vmatprep.subr.bf16.mxu0 0
        %364 = vmatpush1.bf16.msra.mxu0 0
        %365 = vmatprep.subr.bf16.mxu0 0
        %366 = vmatpush1.bf16.msra.mxu0 0
        %367 = vmatprep.subr.bf16.mxu0 0
        %368 = vmatpush1.bf16.msra.mxu0 0
        %369 = vmatprep.subr.bf16.mxu0 0
        %370 = vmatpush1.bf16.msra.mxu0 0
        %371 = vmatprep.subr.bf16.mxu0 0
        %372 = vmatpush1.bf16.msra.mxu0 0
        %373 = vmatprep.subr.bf16.mxu0 0
        %374 = vmatpush1.bf16.msra.mxu0 0
        %375 = vmatprep.subr.bf16.mxu0 0
        %376 = vmatpush1.bf16.msra.mxu0 0
        %377 = vmatprep.subr.bf16.mxu0 0
        %378 = vmatpush1.bf16.msra.mxu0 0
        %379 = vmatprep.mubr.bf16.mxu0 0
        %380 = vmatmul.mubr.bf16.gmra.mrb[0].mxu0 %v345
        %v381 = vpop.f32.mrb[0].mxu0
        %v382 = vadd.f32 0.0, %v381
        %v383 = vpop.f32.mrb[0].mxu0
        %v384 = vpop.f32.mrb[0].mxu0
        %v385 = vpop.f32.mrb[0].mxu0
        %386 = vdwg.mxu0
        %v387 = vpack.c.bf16 %v382, %v382
        %vm388 = vcmask 257024
        %389 = vst.msk [vmem:[#allocation2] sm:$0xf] %vm388, %v387
        %v390 = vld [vmem:[#allocation11] sm:$0xf]
        %v391 = vld [vmem:[#allocation11 + $0x4] sm:$0xf]
        %v392 = vld [vmem:[#allocation11 + $0x8] sm:$0xf]
        %v393 = vld [vmem:[#allocation11 + $0xc] sm:$0xf]
        %v398 = vunpack.c.l.b16 %v390
        %v399 = vunpack.c.l.b16 %v391
        %v400 = vunpack.c.l.b16 %v392
        %v401 = vunpack.c.l.b16 %v393
        %v402 = vpack.c.b16 %v399, %v398
        %v403 = vpack.c.b16 %v401, %v400
        %406 = vmatprep.subr.bf16.mxu0 0
        %407 = vmatpush1.bf16.msra.mxu0 %v402
        %408 = vmatprep.subr.bf16.mxu0 0
        %409 = vmatpush1.bf16.msra.mxu0 %v403
        %410 = vmatprep.subr.bf16.mxu0 0
        %411 = vmatpush1.bf16.msra.mxu0 0
        %412 = vmatprep.subr.bf16.mxu0 0
        %413 = vmatpush1.bf16.msra.mxu0 0
        %414 = vmatprep.subr.bf16.mxu0 0
        %415 = vmatpush1.bf16.msra.mxu0 0
        %416 = vmatprep.subr.bf16.mxu0 0
        %417 = vmatpush1.bf16.msra.mxu0 0
        %418 = vmatprep.subr.bf16.mxu0 0
        %419 = vmatpush1.bf16.msra.mxu0 0
        %420 = vmatprep.subr.bf16.mxu0 0
        %421 = vmatpush1.bf16.msra.mxu0 0
        %422 = vmatprep.subr.bf16.mxu0 0
        %423 = vmatpush1.bf16.msra.mxu0 0
        %424 = vmatprep.subr.bf16.mxu0 0
        %425 = vmatpush1.bf16.msra.mxu0 0
        %426 = vmatprep.subr.bf16.mxu0 0
        %427 = vmatpush1.bf16.msra.mxu0 0
        %428 = vmatprep.subr.bf16.mxu0 0
        %429 = vmatpush1.bf16.msra.mxu0 0
        %430 = vmatprep.subr.bf16.mxu0 0
        %431 = vmatpush1.bf16.msra.mxu0 0
        %432 = vmatprep.subr.bf16.mxu0 0
        %433 = vmatpush1.bf16.msra.mxu0 0
        %434 = vmatprep.subr.bf16.mxu0 0
        %435 = vmatpush1.bf16.msra.mxu0 0
        %436 = vmatprep.subr.bf16.mxu0 0
        %437 = vmatpush1.bf16.msra.mxu0 0
        %438 = vmatprep.mubr.bf16.mxu0 0
        %439 = vmatmul.mubr.bf16.gmra.mrb[0].mxu0 %v345
        %v440 = vpop.f32.mrb[0].mxu0
        %v441 = vadd.f32 0.0, %v440
        %v442 = vpop.f32.mrb[0].mxu0
        %v443 = vpop.f32.mrb[0].mxu0
        %v444 = vpop.f32.mrb[0].mxu0
        %445 = vdwg.mxu0
        %v446 = vpack.c.bf16 %v441, %v441
        %447 = vst.msk [vmem:[#allocation3] sm:$0xf] %vm388, %v446
        %v448 = vld [vmem:[#allocation12] sm:$0xf]
        %v449 = vld [vmem:[#allocation12 + $0x4] sm:$0xf]
        %v450 = vld [vmem:[#allocation12 + $0x8] sm:$0xf]
        %v451 = vld [vmem:[#allocation12 + $0xc] sm:$0xf]
        %v456 = vunpack.c.l.b16 %v448
        %v457 = vunpack.c.l.b16 %v449
        %v458 = vunpack.c.l.b16 %v450
        %v459 = vunpack.c.l.b16 %v451
        %v460 = vpack.c.b16 %v457, %v456
        %v461 = vpack.c.b16 %v459, %v458
        %464 = vmatprep.subr.bf16.mxu0 0
        %465 = vmatpush1.bf16.msra.mxu0 %v460
        %466 = vmatprep.subr.bf16.mxu0 0
        %467 = vmatpush1.bf16.msra.mxu0 %v461
        %468 = vmatprep.subr.bf16.mxu0 0
        %469 = vmatpush1.bf16.msra.mxu0 0
        %470 = vmatprep.subr.bf16.mxu0 0
        %471 = vmatpush1.bf16.msra.mxu0 0
        %472 = vmatprep.subr.bf16.mxu0 0
        %473 = vmatpush1.bf16.msra.mxu0 0
        %474 = vmatprep.subr.bf16.mxu0 0
        %475 = vmatpush1.bf16.msra.mxu0 0
        %476 = vmatprep.subr.bf16.mxu0 0
        %477 = vmatpush1.bf16.msra.mxu0 0
        %478 = vmatprep.subr.bf16.mxu0 0
        %479 = vmatpush1.bf16.msra.mxu0 0
        %480 = vmatprep.subr.bf16.mxu0 0
        %481 = vmatpush1.bf16.msra.mxu0 0
        %482 = vmatprep.subr.bf16.mxu0 0
        %483 = vmatpush1.bf16.msra.mxu0 0
        %484 = vmatprep.subr.bf16.mxu0 0
        %485 = vmatpush1.bf16.msra.mxu0 0
        %486 = vmatprep.subr.bf16.mxu0 0
        %487 = vmatpush1.bf16.msra.mxu0 0
        %488 = vmatprep.subr.bf16.mxu0 0
        %489 = vmatpush1.bf16.msra.mxu0 0
        %490 = vmatprep.subr.bf16.mxu0 0
        %491 = vmatpush1.bf16.msra.mxu0 0
        %492 = vmatprep.subr.bf16.mxu0 0
        %493 = vmatpush1.bf16.msra.mxu0 0
        %494 = vmatprep.subr.bf16.mxu0 0
        %495 = vmatpush1.bf16.msra.mxu0 0
        %496 = vmatprep.mubr.bf16.mxu0 0
        %497 = vmatmul.mubr.bf16.gmra.mrb[0].mxu0 %v345
        %v498 = vpop.f32.mrb[0].mxu0
        %v499 = vadd.f32 0.0, %v498
        %v500 = vpop.f32.mrb[0].mxu0
        %v501 = vpop.f32.mrb[0].mxu0
        %v502 = vpop.f32.mrb[0].mxu0
        %503 = vdwg.mxu0
        %v504 = vpack.c.bf16 %v499, %v499
        %505 = vst.msk [vmem:[#allocation4] sm:$0xf] %vm388, %v504
        %v506 = vld [vmem:[#allocation2] sm:$0xf]
        %v507 = vld [vmem:[#allocation3] sm:$0xf]
        %v508 = vld [vmem:[#allocation4] sm:$0xf]
        %vm509 = vcmask 31744
        %v511 = vsel %vm509, %v506, 0
        %v514 = vsel %vm509, %v507, 0
        %516 = vmatprep.subr.bf16.mxu0 0
        %517 = vmatpush1.bf16.xpose.msra.mxu0 %v514
        %518 = vmatprep.subr.bf16.mxu0 0
        %519 = vmatpush1.bf16.xpose.msra.mxu0 0
        %520 = vmatprep.subr.bf16.mxu0 0
        %521 = vmatpush1.bf16.xpose.msra.mxu0 0
        %522 = vmatprep.subr.bf16.mxu0 0
        %523 = vmatpush1.bf16.xpose.msra.mxu0 0
        %524 = vmatprep.subr.bf16.mxu0 0
        %525 = vmatpush1.bf16.xpose.msra.mxu0 0
        %526 = vmatprep.subr.bf16.mxu0 0
        %527 = vmatpush1.bf16.xpose.msra.mxu0 0
        %528 = vmatprep.subr.bf16.mxu0 0
        %529 = vmatpush1.bf16.xpose.msra.mxu0 0
        %530 = vmatprep.subr.bf16.mxu0 0
        %531 = vmatpush1.bf16.xpose.msra.mxu0 0
        %532 = vmatprep.subr.bf16.mxu0 0
        %533 = vmatpush1.bf16.xpose.msra.mxu0 0
        %534 = vmatprep.subr.bf16.mxu0 0
        %535 = vmatpush1.bf16.xpose.msra.mxu0 0
        %536 = vmatprep.subr.bf16.mxu0 0
        %537 = vmatpush1.bf16.xpose.msra.mxu0 0
        %538 = vmatprep.subr.bf16.mxu0 0
        %539 = vmatpush1.bf16.xpose.msra.mxu0 0
        %540 = vmatprep.subr.bf16.mxu0 0
        %541 = vmatpush1.bf16.xpose.msra.mxu0 0
        %542 = vmatprep.subr.bf16.mxu0 0
        %543 = vmatpush1.bf16.xpose.msra.mxu0 0
        %544 = vmatprep.subr.bf16.mxu0 0
        %545 = vmatpush1.bf16.xpose.msra.mxu0 0
        %546 = vmatprep.subr.bf16.mxu0 0
        %547 = vmatpush1.bf16.xpose.msra.mxu0 0
        %548 = vmatprep.mubr.bf16.mxu0 0
        %549 = vmatmul.mubr.bf16.gmra.mrb[0].mxu0 %v511
        %v550 = vpop.f32.mrb[0].mxu0
        %v551 = vadd.f32 0.0, %v550
        %v552 = vpop.f32.mrb[0].mxu0
        %v553 = vpop.f32.mrb[0].mxu0
        %v554 = vpop.f32.mrb[0].mxu0
        %555 = vdwg.mxu0
        %vm556 = vcmask 64512
        %v557 = vsel %vm556, %v551, -inf
        %558 = vmax.xlane.f32.xlu0 %v557
        %v559 = vpop.xlane.xlu0 %558
        %v560 = vsub.f32 %v551, %v559
        %v561 = vmul.f32 %v560, 1.442695
        %v562 = vpow.pop %v561
        %v563 = vsel %vm556, %v562, 0.0
        %564 = vadd.xlane.f32.xlu0 %v563
        %v565 = vpop.xlane.xlu0 %564
        %v566 = vrcp.pop %v565
        %v567 = vmul.f32 %v562, %v566
        %v568 = vpack.c.bf16 %v567, %v567
        %v570 = vsel %vm556, %v568, 0
        %vm572 = vcmask 1043456
        %v574 = vsel %vm572, %v508, 0
        %576 = vmatprep.subr.bf16.mxu0 0
        %577 = vmatpush1.bf16.msra.mxu0 %v574
        %578 = vmatprep.subr.bf16.mxu0 0
        %579 = vmatpush1.bf16.msra.mxu0 0
        %580 = vmatprep.subr.bf16.mxu0 0
        %581 = vmatpush1.bf16.msra.mxu0 0
        %582 = vmatprep.subr.bf16.mxu0 0
        %583 = vmatpush1.bf16.msra.mxu0 0
        %584 = vmatprep.subr.bf16.mxu0 0
        %585 = vmatpush1.bf16.msra.mxu0 0
        %586 = vmatprep.subr.bf16.mxu0 0
        %587 = vmatpush1.bf16.msra.mxu0 0
        %588 = vmatprep.subr.bf16.mxu0 0
        %589 = vmatpush1.bf16.msra.mxu0 0
        %590 = vmatprep.subr.bf16.mxu0 0
        %591 = vmatpush1.bf16.msra.mxu0 0
        %592 = vmatprep.subr.bf16.mxu0 0
        %593 = vmatpush1.bf16.msra.mxu0 0
        %594 = vmatprep.subr.bf16.mxu0 0
        %595 = vmatpush1.bf16.msra.mxu0 0
        %596 = vmatprep.subr.bf16.mxu0 0
        %597 = vmatpush1.bf16.msra.mxu0 0
        %598 = vmatprep.subr.bf16.mxu0 0
        %599 = vmatpush1.bf16.msra.mxu0 0
        %600 = vmatprep.subr.bf16.mxu0 0
        %601 = vmatpush1.bf16.msra.mxu0 0
        %602 = vmatprep.subr.bf16.mxu0 0
        %603 = vmatpush1.bf16.msra.mxu0 0
        %604 = vmatprep.subr.bf16.mxu0 0
        %605 = vmatpush1.bf16.msra.mxu0 0
        %606 = vmatprep.subr.bf16.mxu0 0
        %607 = vmatpush1.bf16.msra.mxu0 0
        %608 = vmatprep.mubr.bf16.mxu0 0
        %609 = vmatmul.mubr.bf16.gmra.mrb[0].mxu0 %v570
        %v610 = vpop.f32.mrb[0].mxu0
        %v611 = vadd.f32 0.0, %v610
        %v612 = vpop.f32.mrb[0].mxu0
        %v613 = vpop.f32.mrb[0].mxu0
        %v614 = vpop.f32.mrb[0].mxu0
        %615 = vdwg.mxu0
        %v616 = vpack.c.bf16 %v611, %v611
        %vm617 = vcmask 27648
        %618 = vst.msk [vmem:[#allocation5] sm:$0xf] %vm617, %v616
        %v619 = vld [vmem:[#allocation2] sm:$0xf]
        %v620 = vld [vmem:[#allocation3] sm:$0xf]
        %v621 = vld [vmem:[#allocation4] sm:$0xf]
        %v623 = vunpack.c.l.b16 %v619
        %v624 = vpack.c.b16 %v623, %v623
        %625 = vrot.lane.b32.xlu0 %v624, 124
        %v626 = vpop.permute.xlu0 %625
        %v628 = vunpack.c.l.b16 %v620
        %v629 = vpack.c.b16 %v628, %v628
        %630 = vrot.lane.b32.xlu0 %v629, 124
        %v631 = vpop.permute.xlu0 %630
        %v633 = vsel %vm509, %v626, 0
        %v636 = vsel %vm509, %v631, 0
        %638 = vmatprep.subr.bf16.mxu0 0
        %639 = vmatpush1.bf16.xpose.msra.mxu0 %v636
        %640 = vmatprep.subr.bf16.mxu0 0
        %641 = vmatpush1.bf16.xpose.msra.mxu0 0
        %642 = vmatprep.subr.bf16.mxu0 0
        %643 = vmatpush1.bf16.xpose.msra.mxu0 0
        %644 = vmatprep.subr.bf16.mxu0 0
        %645 = vmatpush1.bf16.xpose.msra.mxu0 0
        %646 = vmatprep.subr.bf16.mxu0 0
        %647 = vmatpush1.bf16.xpose.msra.mxu0 0
        %648 = vmatprep.subr.bf16.mxu0 0
        %649 = vmatpush1.bf16.xpose.msra.mxu0 0
        %650 = vmatprep.subr.bf16.mxu0 0
        %651 = vmatpush1.bf16.xpose.msra.mxu0 0
        %652 = vmatprep.subr.bf16.mxu0 0
        %653 = vmatpush1.bf16.xpose.msra.mxu0 0
        %654 = vmatprep.subr.bf16.mxu0 0
        %655 = vmatpush1.bf16.xpose.msra.mxu0 0
        %656 = vmatprep.subr.bf16.mxu0 0
        %657 = vmatpush1.bf16.xpose.msra.mxu0 0
        %658 = vmatprep.subr.bf16.mxu0 0
        %659 = vmatpush1.bf16.xpose.msra.mxu0 0
        %660 = vmatprep.subr.bf16.mxu0 0
        %661 = vmatpush1.bf16.xpose.msra.mxu0 0
        %662 = vmatprep.subr.bf16.mxu0 0
        %663 = vmatpush1.bf16.xpose.msra.mxu0 0
        %664 = vmatprep.subr.bf16.mxu0 0
        %665 = vmatpush1.bf16.xpose.msra.mxu0 0
        %666 = vmatprep.subr.bf16.mxu0 0
        %667 = vmatpush1.bf16.xpose.msra.mxu0 0
        %668 = vmatprep.subr.bf16.mxu0 0
        %669 = vmatpush1.bf16.xpose.msra.mxu0 0
        %670 = vmatprep.mubr.bf16.mxu0 0
        %671 = vmatmul.mubr.bf16.gmra.mrb[0].mxu0 %v633
        %v672 = vpop.f32.mrb[0].mxu0
        %v673 = vadd.f32 0.0, %v672
        %v674 = vpop.f32.mrb[0].mxu0
        %v675 = vpop.f32.mrb[0].mxu0
        %v676 = vpop.f32.mrb[0].mxu0
        %677 = vdwg.mxu0
        %v678 = vsel %vm556, %v673, -inf
        %679 = vmax.xlane.f32.xlu0 %v678
        %v680 = vpop.xlane.xlu0 %679
        %v681 = vsub.f32 %v673, %v680
        %v682 = vmul.f32 %v681, 1.442695
        %v683 = vpow.pop %v682
        %v684 = vsel %vm556, %v683, 0.0
        %685 = vadd.xlane.f32.xlu0 %v684
        %v686 = vpop.xlane.xlu0 %685
        %v687 = vrcp.pop %v686
        %v688 = vmul.f32 %v683, %v687
        %v689 = vpack.c.bf16 %v688, %v688
        %v691 = vunpack.c.l.b16 %v621
        %v692 = vpack.c.b16 %v691, %v691
        %693 = vrot.lane.b32.xlu0 %v692, 124
        %v694 = vpop.permute.xlu0 %693
        %v696 = vsel %vm556, %v689, 0
        %v699 = vsel %vm572, %v694, 0
        %701 = vmatprep.subr.bf16.mxu0 0
        %702 = vmatpush1.bf16.msra.mxu0 %v699
        %703 = vmatprep.subr.bf16.mxu0 0
        %704 = vmatpush1.bf16.msra.mxu0 0
        %705 = vmatprep.subr.bf16.mxu0 0
        %706 = vmatpush1.bf16.msra.mxu0 0
        %707 = vmatprep.subr.bf16.mxu0 0
        %708 = vmatpush1.bf16.msra.mxu0 0
        %709 = vmatprep.subr.bf16.mxu0 0
        %710 = vmatpush1.bf16.msra.mxu0 0
        %711 = vmatprep.subr.bf16.mxu0 0
        %712 = vmatpush1.bf16.msra.mxu0 0
        %713 = vmatprep.subr.bf16.mxu0 0
        %714 = vmatpush1.bf16.msra.mxu0 0
        %715 = vmatprep.subr.bf16.mxu0 0
        %716 = vmatpush1.bf16.msra.mxu0 0
        %717 = vmatprep.subr.bf16.mxu0 0
        %718 = vmatpush1.bf16.msra.mxu0 0
        %719 = vmatprep.subr.bf16.mxu0 0
        %720 = vmatpush1.bf16.msra.mxu0 0
        %721 = vmatprep.subr.bf16.mxu0 0
        %722 = vmatpush1.bf16.msra.mxu0 0
        %723 = vmatprep.subr.bf16.mxu0 0
        %724 = vmatpush1.bf16.msra.mxu0 0
        %725 = vmatprep.subr.bf16.mxu0 0
        %726 = vmatpush1.bf16.msra.mxu0 0
        %727 = vmatprep.subr.bf16.mxu0 0
        %728 = vmatpush1.bf16.msra.mxu0 0
        %729 = vmatprep.subr.bf16.mxu0 0
        %730 = vmatpush1.bf16.msra.mxu0 0
        %731 = vmatprep.subr.bf16.mxu0 0
        %732 = vmatpush1.bf16.msra.mxu0 0
        %733 = vmatprep.mubr.bf16.mxu0 0
        %734 = vmatmul.mubr.bf16.gmra.mrb[0].mxu0 %v696
        %v735 = vpop.f32.mrb[0].mxu0
        %v736 = vadd.f32 0.0, %v735
        %v737 = vpop.f32.mrb[0].mxu0
        %v738 = vpop.f32.mrb[0].mxu0
        %v739 = vpop.f32.mrb[0].mxu0
        %740 = vdwg.mxu0
        %v741 = vpack.c.bf16 %v736, %v736
        %v743 = vunpack.c.l.b16 %v741
        %v744 = vpack.c.b16 %v743, %v743
        %745 = vrot.lane.b32.xlu0 %v744, 4
        %v746 = vpop.permute.xlu0 %745
        %vm748 = vcmask 60448
        %749 = vst.msk [vmem:[#allocation5] sm:$0xf] %vm748, %v746
        %v750 = vld [vmem:[#allocation2] sm:$0xf]
        %v751 = vld [vmem:[#allocation3] sm:$0xf]
        %v752 = vld [vmem:[#allocation4] sm:$0xf]
        %v754 = vunpack.c.l.b16 %v750
        %v755 = vpack.c.b16 %v754, %v754
        %756 = vrot.lane.b32.xlu0 %v755, 120
        %v757 = vpop.permute.xlu0 %756
        %v759 = vunpack.c.l.b16 %v751
        %v760 = vpack.c.b16 %v759, %v759
        %761 = vrot.lane.b32.xlu0 %v760, 120
        %v762 = vpop.permute.xlu0 %761
        %v764 = vsel %vm509, %v757, 0
        %v767 = vsel %vm509, %v762, 0
        %769 = vmatprep.subr.bf16.mxu0 0
        %770 = vmatpush1.bf16.xpose.msra.mxu0 %v767
        %771 = vmatprep.subr.bf16.mxu0 0
        %772 = vmatpush1.bf16.xpose.msra.mxu0 0
        %773 = vmatprep.subr.bf16.mxu0 0
        %774 = vmatpush1.bf16.xpose.msra.mxu0 0
        %775 = vmatprep.subr.bf16.mxu0 0
        %776 = vmatpush1.bf16.xpose.msra.mxu0 0
        %777 = vmatprep.subr.bf16.mxu0 0
        %778 = vmatpush1.bf16.xpose.msra.mxu0 0
        %779 = vmatprep.subr.bf16.mxu0 0
        %780 = vmatpush1.bf16.xpose.msra.mxu0 0
        %781 = vmatprep.subr.bf16.mxu0 0
        %782 = vmatpush1.bf16.xpose.msra.mxu0 0
        %783 = vmatprep.subr.bf16.mxu0 0
        %784 = vmatpush1.bf16.xpose.msra.mxu0 0
        %785 = vmatprep.subr.bf16.mxu0 0
        %786 = vmatpush1.bf16.xpose.msra.mxu0 0
        %787 = vmatprep.subr.bf16.mxu0 0
        %788 = vmatpush1.bf16.xpose.msra.mxu0 0
        %789 = vmatprep.subr.bf16.mxu0 0
        %790 = vmatpush1.bf16.xpose.msra.mxu0 0
        %791 = vmatprep.subr.bf16.mxu0 0
        %792 = vmatpush1.bf16.xpose.msra.mxu0 0
        %793 = vmatprep.subr.bf16.mxu0 0
        %794 = vmatpush1.bf16.xpose.msra.mxu0 0
        %795 = vmatprep.subr.bf16.mxu0 0
        %796 = vmatpush1.bf16.xpose.msra.mxu0 0
        %797 = vmatprep.subr.bf16.mxu0 0
        %798 = vmatpush1.bf16.xpose.msra.mxu0 0
        %799 = vmatprep.subr.bf16.mxu0 0
        %800 = vmatpush1.bf16.xpose.msra.mxu0 0
        %801 = vmatprep.mubr.bf16.mxu0 0
        %802 = vmatmul.mubr.bf16.gmra.mrb[0].mxu0 %v764
        %v803 = vpop.f32.mrb[0].mxu0
        %v804 = vadd.f32 0.0, %v803
        %v805 = vpop.f32.mrb[0].mxu0
        %v806 = vpop.f32.mrb[0].mxu0
        %v807 = vpop.f32.mrb[0].mxu0
        %808 = vdwg.mxu0
        %v809 = vsel %vm556, %v804, -inf
        %810 = vmax.xlane.f32.xlu0 %v809
        %v811 = vpop.xlane.xlu0 %810
        %v812 = vsub.f32 %v804, %v811
        %v813 = vmul.f32 %v812, 1.442695
        %v814 = vpow.pop %v813
        %v815 = vsel %vm556, %v814, 0.0
        %816 = vadd.xlane.f32.xlu0 %v815
        %v817 = vpop.xlane.xlu0 %816
        %v818 = vrcp.pop %v817
        %v819 = vmul.f32 %v814, %v818
        %v820 = vpack.c.bf16 %v819, %v819
        %v822 = vunpack.c.l.b16 %v752
        %v823 = vpack.c.b16 %v822, %v822
        %824 = vrot.lane.b32.xlu0 %v823, 120
        %v825 = vpop.permute.xlu0 %824
        %v827 = vsel %vm556, %v820, 0
        %v830 = vsel %vm572, %v825, 0
        %832 = vmatprep.subr.bf16.mxu0 0
        %833 = vmatpush1.bf16.msra.mxu0 %v830
        %834 = vmatprep.subr.bf16.mxu0 0
        %835 = vmatpush1.bf16.msra.mxu0 0
        %836 = vmatprep.subr.bf16.mxu0 0
        %837 = vmatpush1.bf16.msra.mxu0 0
        %838 = vmatprep.subr.bf16.mxu0 0
        %839 = vmatpush1.bf16.msra.mxu0 0
        %840 = vmatprep.subr.bf16.mxu0 0
        %841 = vmatpush1.bf16.msra.mxu0 0
        %842 = vmatprep.subr.bf16.mxu0 0
        %843 = vmatpush1.bf16.msra.mxu0 0
        %844 = vmatprep.subr.bf16.mxu0 0
        %845 = vmatpush1.bf16.msra.mxu0 0
        %846 = vmatprep.subr.bf16.mxu0 0
        %847 = vmatpush1.bf16.msra.mxu0 0
        %848 = vmatprep.subr.bf16.mxu0 0
        %849 = vmatpush1.bf16.msra.mxu0 0
        %850 = vmatprep.subr.bf16.mxu0 0
        %851 = vmatpush1.bf16.msra.mxu0 0
        %852 = vmatprep.subr.bf16.mxu0 0
        %853 = vmatpush1.bf16.msra.mxu0 0
        %854 = vmatprep.subr.bf16.mxu0 0
        %855 = vmatpush1.bf16.msra.mxu0 0
        %856 = vmatprep.subr.bf16.mxu0 0
        %857 = vmatpush1.bf16.msra.mxu0 0
        %858 = vmatprep.subr.bf16.mxu0 0
        %859 = vmatpush1.bf16.msra.mxu0 0
        %860 = vmatprep.subr.bf16.mxu0 0
        %861 = vmatpush1.bf16.msra.mxu0 0
        %862 = vmatprep.subr.bf16.mxu0 0
        %863 = vmatpush1.bf16.msra.mxu0 0
        %864 = vmatprep.mubr.bf16.mxu0 0
        %865 = vmatmul.mubr.bf16.gmra.mrb[0].mxu0 %v827
        %v866 = vpop.f32.mrb[0].mxu0
        %v867 = vadd.f32 0.0, %v866
        %v868 = vpop.f32.mrb[0].mxu0
        %v869 = vpop.f32.mrb[0].mxu0
        %v870 = vpop.f32.mrb[0].mxu0
        %871 = vdwg.mxu0
        %v872 = vpack.c.bf16 %v867, %v867
        %v874 = vunpack.c.l.b16 %v872
        %v875 = vpack.c.b16 %v874, %v874
        %876 = vrot.lane.b32.xlu0 %v875, 8
        %v877 = vpop.permute.xlu0 %876
        %vm879 = vcmask 93248
        %880 = vst.msk [vmem:[#allocation5] sm:$0xf] %vm879, %v877
        %v881 = vld [vmem:[#allocation2] sm:$0xf]
        %v882 = vld [vmem:[#allocation3] sm:$0xf]
        %v883 = vld [vmem:[#allocation4] sm:$0xf]
        %v885 = vunpack.c.l.b16 %v881
        %v886 = vpack.c.b16 %v885, %v885
        %887 = vrot.lane.b32.xlu0 %v886, 116
        %v888 = vpop.permute.xlu0 %887
        %v890 = vunpack.c.l.b16 %v882
        %v891 = vpack.c.b16 %v890, %v890
        %892 = vrot.lane.b32.xlu0 %v891, 116
        %v893 = vpop.permute.xlu0 %892
        %v895 = vsel %vm509, %v888, 0
        %v898 = vsel %vm509, %v893, 0
        %900 = vmatprep.subr.bf16.mxu0 0
        %901 = vmatpush1.bf16.xpose.msra.mxu0 %v898
        %902 = vmatprep.subr.bf16.mxu0 0
        %903 = vmatpush1.bf16.xpose.msra.mxu0 0
        %904 = vmatprep.subr.bf16.mxu0 0
        %905 = vmatpush1.bf16.xpose.msra.mxu0 0
        %906 = vmatprep.subr.bf16.mxu0 0
        %907 = vmatpush1.bf16.xpose.msra.mxu0 0
        %908 = vmatprep.subr.bf16.mxu0 0
        %909 = vmatpush1.bf16.xpose.msra.mxu0 0
        %910 = vmatprep.subr.bf16.mxu0 0
        %911 = vmatpush1.bf16.xpose.msra.mxu0 0
        %912 = vmatprep.subr.bf16.mxu0 0
        %913 = vmatpush1.bf16.xpose.msra.mxu0 0
        %914 = vmatprep.subr.bf16.mxu0 0
        %915 = vmatpush1.bf16.xpose.msra.mxu0 0
        %916 = vmatprep.subr.bf16.mxu0 0
        %917 = vmatpush1.bf16.xpose.msra.mxu0 0
        %918 = vmatprep.subr.bf16.mxu0 0
        %919 = vmatpush1.bf16.xpose.msra.mxu0 0
        %920 = vmatprep.subr.bf16.mxu0 0
        %921 = vmatpush1.bf16.xpose.msra.mxu0 0
        %922 = vmatprep.subr.bf16.mxu0 0
        %923 = vmatpush1.bf16.xpose.msra.mxu0 0
        %924 = vmatprep.subr.bf16.mxu0 0
        %925 = vmatpush1.bf16.xpose.msra.mxu0 0
        %926 = vmatprep.subr.bf16.mxu0 0
        %927 = vmatpush1.bf16.xpose.msra.mxu0 0
        %928 = vmatprep.subr.bf16.mxu0 0
        %929 = vmatpush1.bf16.xpose.msra.mxu0 0
        %930 = vmatprep.subr.bf16.mxu0 0
        %931 = vmatpush1.bf16.xpose.msra.mxu0 0
        %932 = vmatprep.mubr.bf16.mxu0 0
        %933 = vmatmul.mubr.bf16.gmra.mrb[0].mxu0 %v895
        %v934 = vpop.f32.mrb[0].mxu0
        %v935 = vadd.f32 0.0, %v934
        %v936 = vpop.f32.mrb[0].mxu0
        %v937 = vpop.f32.mrb[0].mxu0
        %v938 = vpop.f32.mrb[0].mxu0
        %939 = vdwg.mxu0
        %v940 = vsel %vm556, %v935, -inf
        %941 = vmax.xlane.f32.xlu0 %v940
        %v942 = vpop.xlane.xlu0 %941
        %v943 = vsub.f32 %v935, %v942
        %v944 = vmul.f32 %v943, 1.442695
        %v945 = vpow.pop %v944
        %v946 = vsel %vm556, %v945, 0.0
        %947 = vadd.xlane.f32.xlu0 %v946
        %v948 = vpop.xlane.xlu0 %947
        %v949 = vrcp.pop %v948
        %v950 = vmul.f32 %v945, %v949
        %v951 = vpack.c.bf16 %v950, %v950
        %v953 = vunpack.c.l.b16 %v883
        %v954 = vpack.c.b16 %v953, %v953
        %955 = vrot.lane.b32.xlu0 %v954, 116
        %v956 = vpop.permute.xlu0 %955
        %v958 = vsel %vm556, %v951, 0
        %v961 = vsel %vm572, %v956, 0
        %963 = vmatprep.subr.bf16.mxu0 0
        %964 = vmatpush1.bf16.msra.mxu0 %v961
        %965 = vmatprep.subr.bf16.mxu0 0
        %966 = vmatpush1.bf16.msra.mxu0 0
        %967 = vmatprep.subr.bf16.mxu0 0
        %968 = vmatpush1.bf16.msra.mxu0 0
        %969 = vmatprep.subr.bf16.mxu0 0
        %970 = vmatpush1.bf16.msra.mxu0 0
        %971 = vmatprep.subr.bf16.mxu0 0
        %972 = vmatpush1.bf16.msra.mxu0 0
        %973 = vmatprep.subr.bf16.mxu0 0
        %974 = vmatpush1.bf16.msra.mxu0 0
        %975 = vmatprep.subr.bf16.mxu0 0
        %976 = vmatpush1.bf16.msra.mxu0 0
        %977 = vmatprep.subr.bf16.mxu0 0
        %978 = vmatpush1.bf16.msra.mxu0 0
        %979 = vmatprep.subr.bf16.mxu0 0
        %980 = vmatpush1.bf16.msra.mxu0 0
        %981 = vmatprep.subr.bf16.mxu0 0
        %982 = vmatpush1.bf16.msra.mxu0 0
        %983 = vmatprep.subr.bf16.mxu0 0
        %984 = vmatpush1.bf16.msra.mxu0 0
        %985 = vmatprep.subr.bf16.mxu0 0
        %986 = vmatpush1.bf16.msra.mxu0 0
        %987 = vmatprep.subr.bf16.mxu0 0
        %988 = vmatpush1.bf16.msra.mxu0 0
        %989 = vmatprep.subr.bf16.mxu0 0
        %990 = vmatpush1.bf16.msra.mxu0 0
        %991 = vmatprep.subr.bf16.mxu0 0
        %992 = vmatpush1.bf16.msra.mxu0 0
        %993 = vmatprep.subr.bf16.mxu0 0
        %994 = vmatpush1.bf16.msra.mxu0 0
        %995 = vmatprep.mubr.bf16.mxu0 0
        %996 = vmatmul.mubr.bf16.gmra.mrb[0].mxu0 %v958
        %v997 = vpop.f32.mrb[0].mxu0
        %v998 = vadd.f32 0.0, %v997
        %v999 = vpop.f32.mrb[0].mxu0
        %v1000 = vpop.f32.mrb[0].mxu0
        %v1001 = vpop.f32.mrb[0].mxu0
        %1002 = vdwg.mxu0
        %v1003 = vpack.c.bf16 %v998, %v998
        %v1005 = vunpack.c.l.b16 %v1003
        %v1006 = vpack.c.b16 %v1005, %v1005
        %1007 = vrot.lane.b32.xlu0 %v1006, 12
        %v1008 = vpop.permute.xlu0 %1007
        %vm1010 = vcmask 126048
        %1011 = vst.msk [vmem:[#allocation5] sm:$0xf] %vm1010, %v1008
        %v1012 = vld [vmem:[#allocation2] sm:$0xf]
        %v1013 = vld [vmem:[#allocation3] sm:$0xf]
        %v1014 = vld [vmem:[#allocation4] sm:$0xf]
        %v1016 = vunpack.c.l.b16 %v1012
        %v1017 = vpack.c.b16 %v1016, %v1016
        %1018 = vrot.lane.b32.xlu0 %v1017, 112
        %v1019 = vpop.permute.xlu0 %1018
        %v1021 = vunpack.c.l.b16 %v1013
        %v1022 = vpack.c.b16 %v1021, %v1021
        %1023 = vrot.lane.b32.xlu0 %v1022, 112
        %v1024 = vpop.permute.xlu0 %1023
        %v1026 = vsel %vm509, %v1019, 0
        %v1029 = vsel %vm509, %v1024, 0
        %1031 = vmatprep.subr.bf16.mxu0 0
        %1032 = vmatpush1.bf16.xpose.msra.mxu0 %v1029
        %1033 = vmatprep.subr.bf16.mxu0 0
        %1034 = vmatpush1.bf16.xpose.msra.mxu0 0
        %1035 = vmatprep.subr.bf16.mxu0 0
        %1036 = vmatpush1.bf16.xpose.msra.mxu0 0
        %1037 = vmatprep.subr.bf16.mxu0 0
        %1038 = vmatpush1.bf16.xpose.msra.mxu0 0
        %1039 = vmatprep.subr.bf16.mxu0 0
        %1040 = vmatpush1.bf16.xpose.msra.mxu0 0
        %1041 = vmatprep.subr.bf16.mxu0 0
        %1042 = vmatpush1.bf16.xpose.msra.mxu0 0
        %1043 = vmatprep.subr.bf16.mxu0 0
        %1044 = vmatpush1.bf16.xpose.msra.mxu0 0
        %1045 = vmatprep.subr.bf16.mxu0 0
        %1046 = vmatpush1.bf16.xpose.msra.mxu0 0
        %1047 = vmatprep.subr.bf16.mxu0 0
        %1048 = vmatpush1.bf16.xpose.msra.mxu0 0
        %1049 = vmatprep.subr.bf16.mxu0 0
        %1050 = vmatpush1.bf16.xpose.msra.mxu0 0
        %1051 = vmatprep.subr.bf16.mxu0 0
        %1052 = vmatpush1.bf16.xpose.msra.mxu0 0
        %1053 = vmatprep.subr.bf16.mxu0 0
        %1054 = vmatpush1.bf16.xpose.msra.mxu0 0
        %1055 = vmatprep.subr.bf16.mxu0 0
        %1056 = vmatpush1.bf16.xpose.msra.mxu0 0
        %1057 = vmatprep.subr.bf16.mxu0 0
        %1058 = vmatpush1.bf16.xpose.msra.mxu0 0
        %1059 = vmatprep.subr.bf16.mxu0 0
        %1060 = vmatpush1.bf16.xpose.msra.mxu0 0
        %1061 = vmatprep.subr.bf16.mxu0 0
        %1062 = vmatpush1.bf16.xpose.msra.mxu0 0
        %1063 = vmatprep.mubr.bf16.mxu0 0
        %1064 = vmatmul.mubr.bf16.gmra.mrb[0].mxu0 %v1026
        %v1065 = vpop.f32.mrb[0].mxu0
        %v1066 = vadd.f32 0.0, %v1065
        %v1067 = vpop.f32.mrb[0].mxu0
        %v1068 = vpop.f32.mrb[0].mxu0
        %v1069 = vpop.f32.mrb[0].mxu0
        %1070 = vdwg.mxu0
        %v1071 = vsel %vm556, %v1066, -inf
        %1072 = vmax.xlane.f32.xlu0 %v1071
        %v1073 = vpop.xlane.xlu0 %1072
        %v1074 = vsub.f32 %v1066, %v1073
        %v1075 = vmul.f32 %v1074, 1.442695
        %v1076 = vpow.pop %v1075
        %v1077 = vsel %vm556, %v1076, 0.0
        %1078 = vadd.xlane.f32.xlu0 %v1077
        %v1079 = vpop.xlane.xlu0 %1078
        %v1080 = vrcp.pop %v1079
        %v1081 = vmul.f32 %v1076, %v1080
        %v1082 = vpack.c.bf16 %v1081, %v1081
        %v1084 = vunpack.c.l.b16 %v1014
        %v1085 = vpack.c.b16 %v1084, %v1084
        %1086 = vrot.lane.b32.xlu0 %v1085, 112
        %v1087 = vpop.permute.xlu0 %1086
        %v1089 = vsel %vm556, %v1082, 0
        %v1092 = vsel %vm572, %v1087, 0
        %1094 = vmatprep.subr.bf16.mxu0 0
        %1095 = vmatpush1.bf16.msra.mxu0 %v1092
        %1096 = vmatprep.subr.bf16.mxu0 0
        %1097 = vmatpush1.bf16.msra.mxu0 0
        %1098 = vmatprep.subr.bf16.mxu0 0
        %1099 = vmatpush1.bf16.msra.mxu0 0
        %1100 = vmatprep.subr.bf16.mxu0 0
        %1101 = vmatpush1.bf16.msra.mxu0 0
        %1102 = vmatprep.subr.bf16.mxu0 0
        %1103 = vmatpush1.bf16.msra.mxu0 0
        %1104 = vmatprep.subr.bf16.mxu0 0
        %1105 = vmatpush1.bf16.msra.mxu0 0
        %1106 = vmatprep.subr.bf16.mxu0 0
        %1107 = vmatpush1.bf16.msra.mxu0 0
        %1108 = vmatprep.subr.bf16.mxu0 0
        %1109 = vmatpush1.bf16.msra.mxu0 0
        %1110 = vmatprep.subr.bf16.mxu0 0
        %1111 = vmatpush1.bf16.msra.mxu0 0
        %1112 = vmatprep.subr.bf16.mxu0 0
        %1113 = vmatpush1.bf16.msra.mxu0 0
        %1114 = vmatprep.subr.bf16.mxu0 0
        %1115 = vmatpush1.bf16.msra.mxu0 0
        %1116 = vmatprep.subr.bf16.mxu0 0
        %1117 = vmatpush1.bf16.msra.mxu0 0
        %1118 = vmatprep.subr.bf16.mxu0 0
        %1119 = vmatpush1.bf16.msra.mxu0 0
        %1120 = vmatprep.subr.bf16.mxu0 0
        %1121 = vmatpush1.bf16.msra.mxu0 0
        %1122 = vmatprep.subr.bf16.mxu0 0
        %1123 = vmatpush1.bf16.msra.mxu0 0
        %1124 = vmatprep.subr.bf16.mxu0 0
        %1125 = vmatpush1.bf16.msra.mxu0 0
        %1126 = vmatprep.mubr.bf16.mxu0 0
        %1127 = vmatmul.mubr.bf16.gmra.mrb[0].mxu0 %v1089
        %v1128 = vpop.f32.mrb[0].mxu0
        %v1129 = vadd.f32 0.0, %v1128
        %v1130 = vpop.f32.mrb[0].mxu0
        %v1131 = vpop.f32.mrb[0].mxu0
        %v1132 = vpop.f32.mrb[0].mxu0
        %1133 = vdwg.mxu0
        %v1134 = vpack.c.bf16 %v1129, %v1129
        %v1136 = vunpack.c.l.b16 %v1134
        %v1137 = vpack.c.b16 %v1136, %v1136
        %1138 = vrot.lane.b32.xlu0 %v1137, 16
        %v1139 = vpop.permute.xlu0 %1138
        %vm1141 = vcmask 158848
        %1142 = vst.msk [vmem:[#allocation5] sm:$0xf] %vm1141, %v1139
        %v1143 = vld [vmem:[#allocation2] sm:$0xf]
        %v1144 = vld [vmem:[#allocation3] sm:$0xf]
        %v1145 = vld [vmem:[#allocation4] sm:$0xf]
        %v1147 = vunpack.c.l.b16 %v1143
        %v1148 = vpack.c.b16 %v1147, %v1147
        %1149 = vrot.lane.b32.xlu0 %v1148, 108
        %v1150 = vpop.permute.xlu0 %1149
        %v1152 = vunpack.c.l.b16 %v1144
        %v1153 = vpack.c.b16 %v1152, %v1152
        %1154 = vrot.lane.b32.xlu0 %v1153, 108
        %v1155 = vpop.permute.xlu0 %1154
        %v1157 = vsel %vm509, %v1150, 0
        %v1160 = vsel %vm509, %v1155, 0
        %1162 = vmatprep.subr.bf16.mxu0 0
        %1163 = vmatpush1.bf16.xpose.msra.mxu0 %v1160
        %1164 = vmatprep.subr.bf16.mxu0 0
        %1165 = vmatpush1.bf16.xpose.msra.mxu0 0
        %1166 = vmatprep.subr.bf16.mxu0 0
        %1167 = vmatpush1.bf16.xpose.msra.mxu0 0
        %1168 = vmatprep.subr.bf16.mxu0 0
        %1169 = vmatpush1.bf16.xpose.msra.mxu0 0
        %1170 = vmatprep.subr.bf16.mxu0 0
        %1171 = vmatpush1.bf16.xpose.msra.mxu0 0
        %1172 = vmatprep.subr.bf16.mxu0 0
        %1173 = vmatpush1.bf16.xpose.msra.mxu0 0
        %1174 = vmatprep.subr.bf16.mxu0 0
        %1175 = vmatpush1.bf16.xpose.msra.mxu0 0
        %1176 = vmatprep.subr.bf16.mxu0 0
        %1177 = vmatpush1.bf16.xpose.msra.mxu0 0
        %1178 = vmatprep.subr.bf16.mxu0 0
        %1179 = vmatpush1.bf16.xpose.msra.mxu0 0
        %1180 = vmatprep.subr.bf16.mxu0 0
        %1181 = vmatpush1.bf16.xpose.msra.mxu0 0
        %1182 = vmatprep.subr.bf16.mxu0 0
        %1183 = vmatpush1.bf16.xpose.msra.mxu0 0
        %1184 = vmatprep.subr.bf16.mxu0 0
        %1185 = vmatpush1.bf16.xpose.msra.mxu0 0
        %1186 = vmatprep.subr.bf16.mxu0 0
        %1187 = vmatpush1.bf16.xpose.msra.mxu0 0
        %1188 = vmatprep.subr.bf16.mxu0 0
        %1189 = vmatpush1.bf16.xpose.msra.mxu0 0
        %1190 = vmatprep.subr.bf16.mxu0 0
        %1191 = vmatpush1.bf16.xpose.msra.mxu0 0
        %1192 = vmatprep.subr.bf16.mxu0 0
        %1193 = vmatpush1.bf16.xpose.msra.mxu0 0
        %1194 = vmatprep.mubr.bf16.mxu0 0
        %1195 = vmatmul.mubr.bf16.gmra.mrb[0].mxu0 %v1157
        %v1196 = vpop.f32.mrb[0].mxu0
        %v1197 = vadd.f32 0.0, %v1196
        %v1198 = vpop.f32.mrb[0].mxu0
        %v1199 = vpop.f32.mrb[0].mxu0
        %v1200 = vpop.f32.mrb[0].mxu0
        %1201 = vdwg.mxu0
        %v1202 = vsel %vm556, %v1197, -inf
        %1203 = vmax.xlane.f32.xlu0 %v1202
        %v1204 = vpop.xlane.xlu0 %1203
        %v1205 = vsub.f32 %v1197, %v1204
        %v1206 = vmul.f32 %v1205, 1.442695
        %v1207 = vpow.pop %v1206
        %v1208 = vsel %vm556, %v1207, 0.0
        %1209 = vadd.xlane.f32.xlu0 %v1208
        %v1210 = vpop.xlane.xlu0 %1209
        %v1211 = vrcp.pop %v1210
        %v1212 = vmul.f32 %v1207, %v1211
        %v1213 = vpack.c.bf16 %v1212, %v1212
        %v1215 = vunpack.c.l.b16 %v1145
        %v1216 = vpack.c.b16 %v1215, %v1215
        %1217 = vrot.lane.b32.xlu0 %v1216, 108
        %v1218 = vpop.permute.xlu0 %1217
        %v1220 = vsel %vm556, %v1213, 0
        %v1223 = vsel %vm572, %v1218, 0
        %1225 = vmatprep.subr.bf16.mxu0 0
        %1226 = vmatpush1.bf16.msra.mxu0 %v1223
        %1227 = vmatprep.subr.bf16.mxu0 0
        %1228 = vmatpush1.bf16.msra.mxu0 0
        %1229 = vmatprep.subr.bf16.mxu0 0
        %1230 = vmatpush1.bf16.msra.mxu0 0
        %1231 = vmatprep.subr.bf16.mxu0 0
        %1232 = vmatpush1.bf16.msra.mxu0 0
        %1233 = vmatprep.subr.bf16.mxu0 0
        %1234 = vmatpush1.bf16.msra.mxu0 0
        %1235 = vmatprep.subr.bf16.mxu0 0
        %1236 = vmatpush1.bf16.msra.mxu0 0
        %1237 = vmatprep.subr.bf16.mxu0 0
        %1238 = vmatpush1.bf16.msra.mxu0 0
        %1239 = vmatprep.subr.bf16.mxu0 0
        %1240 = vmatpush1.bf16.msra.mxu0 0
        %1241 = vmatprep.subr.bf16.mxu0 0
        %1242 = vmatpush1.bf16.msra.mxu0 0
        %1243 = vmatprep.subr.bf16.mxu0 0
        %1244 = vmatpush1.bf16.msra.mxu0 0
        %1245 = vmatprep.subr.bf16.mxu0 0
        %1246 = vmatpush1.bf16.msra.mxu0 0
        %1247 = vmatprep.subr.bf16.mxu0 0
        %1248 = vmatpush1.bf16.msra.mxu0 0
        %1249 = vmatprep.subr.bf16.mxu0 0
        %1250 = vmatpush1.bf16.msra.mxu0 0
        %1251 = vmatprep.subr.bf16.mxu0 0
        %1252 = vmatpush1.bf16.msra.mxu0 0
        %1253 = vmatprep.subr.bf16.mxu0 0
        %1254 = vmatpush1.bf16.msra.mxu0 0
        %1255 = vmatprep.subr.bf16.mxu0 0
        %1256 = vmatpush1.bf16.msra.mxu0 0
        %1257 = vmatprep.mubr.bf16.mxu0 0
        %1258 = vmatmul.mubr.bf16.gmra.mrb[0].mxu0 %v1220
        %v1259 = vpop.f32.mrb[0].mxu0
        %v1260 = vadd.f32 0.0, %v1259
        %v1261 = vpop.f32.mrb[0].mxu0
        %v1262 = vpop.f32.mrb[0].mxu0
        %v1263 = vpop.f32.mrb[0].mxu0
        %1264 = vdwg.mxu0
        %v1265 = vpack.c.bf16 %v1260, %v1260
        %v1267 = vunpack.c.l.b16 %v1265
        %v1268 = vpack.c.b16 %v1267, %v1267
        %1269 = vrot.lane.b32.xlu0 %v1268, 20
        %v1270 = vpop.permute.xlu0 %1269
        %vm1272 = vcmask 191648
        %1273 = vst.msk [vmem:[#allocation5] sm:$0xf] %vm1272, %v1270
        %v1274 = vld [vmem:[#allocation2] sm:$0xf]
        %v1275 = vld [vmem:[#allocation3] sm:$0xf]
        %v1276 = vld [vmem:[#allocation4] sm:$0xf]
        %v1278 = vunpack.c.l.b16 %v1274
        %v1279 = vpack.c.b16 %v1278, %v1278
        %1280 = vrot.lane.b32.xlu0 %v1279, 104
        %v1281 = vpop.permute.xlu0 %1280
        %v1283 = vunpack.c.l.b16 %v1275
        %v1284 = vpack.c.b16 %v1283, %v1283
        %1285 = vrot.lane.b32.xlu0 %v1284, 104
        %v1286 = vpop.permute.xlu0 %1285
        %v1288 = vsel %vm509, %v1281, 0
        %v1291 = vsel %vm509, %v1286, 0
        %1293 = vmatprep.subr.bf16.mxu0 0
        %1294 = vmatpush1.bf16.xpose.msra.mxu0 %v1291
        %1295 = vmatprep.subr.bf16.mxu0 0
        %1296 = vmatpush1.bf16.xpose.msra.mxu0 0
        %1297 = vmatprep.subr.bf16.mxu0 0
        %1298 = vmatpush1.bf16.xpose.msra.mxu0 0
        %1299 = vmatprep.subr.bf16.mxu0 0
        %1300 = vmatpush1.bf16.xpose.msra.mxu0 0
        %1301 = vmatprep.subr.bf16.mxu0 0
        %1302 = vmatpush1.bf16.xpose.msra.mxu0 0
        %1303 = vmatprep.subr.bf16.mxu0 0
        %1304 = vmatpush1.bf16.xpose.msra.mxu0 0
        %1305 = vmatprep.subr.bf16.mxu0 0
        %1306 = vmatpush1.bf16.xpose.msra.mxu0 0
        %1307 = vmatprep.subr.bf16.mxu0 0
        %1308 = vmatpush1.bf16.xpose.msra.mxu0 0
        %1309 = vmatprep.subr.bf16.mxu0 0
        %1310 = vmatpush1.bf16.xpose.msra.mxu0 0
        %1311 = vmatprep.subr.bf16.mxu0 0
        %1312 = vmatpush1.bf16.xpose.msra.mxu0 0
        %1313 = vmatprep.subr.bf16.mxu0 0
        %1314 = vmatpush1.bf16.xpose.msra.mxu0 0
        %1315 = vmatprep.subr.bf16.mxu0 0
        %1316 = vmatpush1.bf16.xpose.msra.mxu0 0
        %1317 = vmatprep.subr.bf16.mxu0 0
        %1318 = vmatpush1.bf16.xpose.msra.mxu0 0
        %1319 = vmatprep.subr.bf16.mxu0 0
        %1320 = vmatpush1.bf16.xpose.msra.mxu0 0
        %1321 = vmatprep.subr.bf16.mxu0 0
        %1322 = vmatpush1.bf16.xpose.msra.mxu0 0
        %1323 = vmatprep.subr.bf16.mxu0 0
        %1324 = vmatpush1.bf16.xpose.msra.mxu0 0
        %1325 = vmatprep.mubr.bf16.mxu0 0
        %1326 = vmatmul.mubr.bf16.gmra.mrb[0].mxu0 %v1288
        %v1327 = vpop.f32.mrb[0].mxu0
        %v1328 = vadd.f32 0.0, %v1327
        %v1329 = vpop.f32.mrb[0].mxu0
        %v1330 = vpop.f32.mrb[0].mxu0
        %v1331 = vpop.f32.mrb[0].mxu0
        %1332 = vdwg.mxu0
        %v1333 = vsel %vm556, %v1328, -inf
        %1334 = vmax.xlane.f32.xlu0 %v1333
        %v1335 = vpop.xlane.xlu0 %1334
        %v1336 = vsub.f32 %v1328, %v1335
        %v1337 = vmul.f32 %v1336, 1.442695
        %v1338 = vpow.pop %v1337
        %v1339 = vsel %vm556, %v1338, 0.0
        %1340 = vadd.xlane.f32.xlu0 %v1339
        %v1341 = vpop.xlane.xlu0 %1340
        %v1342 = vrcp.pop %v1341
        %v1343 = vmul.f32 %v1338, %v1342
        %v1344 = vpack.c.bf16 %v1343, %v1343
        %v1346 = vunpack.c.l.b16 %v1276
        %v1347 = vpack.c.b16 %v1346, %v1346
        %1348 = vrot.lane.b32.xlu0 %v1347, 104
        %v1349 = vpop.permute.xlu0 %1348
        %v1351 = vsel %vm556, %v1344, 0
        %v1354 = vsel %vm572, %v1349, 0
        %1356 = vmatprep.subr.bf16.mxu0 0
        %1357 = vmatpush1.bf16.msra.mxu0 %v1354
        %1358 = vmatprep.subr.bf16.mxu0 0
        %1359 = vmatpush1.bf16.msra.mxu0 0
        %1360 = vmatprep.subr.bf16.mxu0 0
        %1361 = vmatpush1.bf16.msra.mxu0 0
        %1362 = vmatprep.subr.bf16.mxu0 0
        %1363 = vmatpush1.bf16.msra.mxu0 0
        %1364 = vmatprep.subr.bf16.mxu0 0
        %1365 = vmatpush1.bf16.msra.mxu0 0
        %1366 = vmatprep.subr.bf16.mxu0 0
        %1367 = vmatpush1.bf16.msra.mxu0 0
        %1368 = vmatprep.subr.bf16.mxu0 0
        %1369 = vmatpush1.bf16.msra.mxu0 0
        %1370 = vmatprep.subr.bf16.mxu0 0
        %1371 = vmatpush1.bf16.msra.mxu0 0
        %1372 = vmatprep.subr.bf16.mxu0 0
        %1373 = vmatpush1.bf16.msra.mxu0 0
        %1374 = vmatprep.subr.bf16.mxu0 0
        %1375 = vmatpush1.bf16.msra.mxu0 0
        %1376 = vmatprep.subr.bf16.mxu0 0
        %1377 = vmatpush1.bf16.msra.mxu0 0
        %1378 = vmatprep.subr.bf16.mxu0 0
        %1379 = vmatpush1.bf16.msra.mxu0 0
        %1380 = vmatprep.subr.bf16.mxu0 0
        %1381 = vmatpush1.bf16.msra.mxu0 0
        %1382 = vmatprep.subr.bf16.mxu0 0
        %1383 = vmatpush1.bf16.msra.mxu0 0
        %1384 = vmatprep.subr.bf16.mxu0 0
        %1385 = vmatpush1.bf16.msra.mxu0 0
        %1386 = vmatprep.subr.bf16.mxu0 0
        %1387 = vmatpush1.bf16.msra.mxu0 0
        %1388 = vmatprep.mubr.bf16.mxu0 0
        %1389 = vmatmul.mubr.bf16.gmra.mrb[0].mxu0 %v1351
        %v1390 = vpop.f32.mrb[0].mxu0
        %v1391 = vadd.f32 0.0, %v1390
        %v1392 = vpop.f32.mrb[0].mxu0
        %v1393 = vpop.f32.mrb[0].mxu0
        %v1394 = vpop.f32.mrb[0].mxu0
        %1395 = vdwg.mxu0
        %v1396 = vpack.c.bf16 %v1391, %v1391
        %v1398 = vunpack.c.l.b16 %v1396
        %v1399 = vpack.c.b16 %v1398, %v1398
        %1400 = vrot.lane.b32.xlu0 %v1399, 24
        %v1401 = vpop.permute.xlu0 %1400
        %vm1403 = vcmask 224448
        %1404 = vst.msk [vmem:[#allocation5] sm:$0xf] %vm1403, %v1401
        %v1405 = vld [vmem:[#allocation2] sm:$0xf]
        %v1406 = vld [vmem:[#allocation3] sm:$0xf]
        %v1407 = vld [vmem:[#allocation4] sm:$0xf]
        %v1409 = vunpack.c.l.b16 %v1405
        %v1410 = vpack.c.b16 %v1409, %v1409
        %1411 = vrot.lane.b32.xlu0 %v1410, 100
        %v1412 = vpop.permute.xlu0 %1411
        %v1414 = vunpack.c.l.b16 %v1406
        %v1415 = vpack.c.b16 %v1414, %v1414
        %1416 = vrot.lane.b32.xlu0 %v1415, 100
        %v1417 = vpop.permute.xlu0 %1416
        %v1419 = vsel %vm509, %v1412, 0
        %v1422 = vsel %vm509, %v1417, 0
        %1424 = vmatprep.subr.bf16.mxu0 0
        %1425 = vmatpush1.bf16.xpose.msra.mxu0 %v1422
        %1426 = vmatprep.subr.bf16.mxu0 0
        %1427 = vmatpush1.bf16.xpose.msra.mxu0 0
        %1428 = vmatprep.subr.bf16.mxu0 0
        %1429 = vmatpush1.bf16.xpose.msra.mxu0 0
        %1430 = vmatprep.subr.bf16.mxu0 0
        %1431 = vmatpush1.bf16.xpose.msra.mxu0 0
        %1432 = vmatprep.subr.bf16.mxu0 0
        %1433 = vmatpush1.bf16.xpose.msra.mxu0 0
        %1434 = vmatprep.subr.bf16.mxu0 0
        %1435 = vmatpush1.bf16.xpose.msra.mxu0 0
        %1436 = vmatprep.subr.bf16.mxu0 0
        %1437 = vmatpush1.bf16.xpose.msra.mxu0 0
        %1438 = vmatprep.subr.bf16.mxu0 0
        %1439 = vmatpush1.bf16.xpose.msra.mxu0 0
        %1440 = vmatprep.subr.bf16.mxu0 0
        %1441 = vmatpush1.bf16.xpose.msra.mxu0 0
        %1442 = vmatprep.subr.bf16.mxu0 0
        %1443 = vmatpush1.bf16.xpose.msra.mxu0 0
        %1444 = vmatprep.subr.bf16.mxu0 0
        %1445 = vmatpush1.bf16.xpose.msra.mxu0 0
        %1446 = vmatprep.subr.bf16.mxu0 0
        %1447 = vmatpush1.bf16.xpose.msra.mxu0 0
        %1448 = vmatprep.subr.bf16.mxu0 0
        %1449 = vmatpush1.bf16.xpose.msra.mxu0 0
        %1450 = vmatprep.subr.bf16.mxu0 0
        %1451 = vmatpush1.bf16.xpose.msra.mxu0 0
        %1452 = vmatprep.subr.bf16.mxu0 0
        %1453 = vmatpush1.bf16.xpose.msra.mxu0 0
        %1454 = vmatprep.subr.bf16.mxu0 0
        %1455 = vmatpush1.bf16.xpose.msra.mxu0 0
        %1456 = vmatprep.mubr.bf16.mxu0 0
        %1457 = vmatmul.mubr.bf16.gmra.mrb[0].mxu0 %v1419
        %v1458 = vpop.f32.mrb[0].mxu0
        %v1459 = vadd.f32 0.0, %v1458
        %v1460 = vpop.f32.mrb[0].mxu0
        %v1461 = vpop.f32.mrb[0].mxu0
        %v1462 = vpop.f32.mrb[0].mxu0
        %1463 = vdwg.mxu0
        %v1464 = vsel %vm556, %v1459, -inf
        %1465 = vmax.xlane.f32.xlu0 %v1464
        %v1466 = vpop.xlane.xlu0 %1465
        %v1467 = vsub.f32 %v1459, %v1466
        %v1468 = vmul.f32 %v1467, 1.442695
        %v1469 = vpow.pop %v1468
        %v1470 = vsel %vm556, %v1469, 0.0
        %1471 = vadd.xlane.f32.xlu0 %v1470
        %v1472 = vpop.xlane.xlu0 %1471
        %v1473 = vrcp.pop %v1472
        %v1474 = vmul.f32 %v1469, %v1473
        %v1475 = vpack.c.bf16 %v1474, %v1474
        %v1477 = vunpack.c.l.b16 %v1407
        %v1478 = vpack.c.b16 %v1477, %v1477
        %1479 = vrot.lane.b32.xlu0 %v1478, 100
        %v1480 = vpop.permute.xlu0 %1479
        %v1482 = vsel %vm556, %v1475, 0
        %v1485 = vsel %vm572, %v1480, 0
        %1487 = vmatprep.subr.bf16.mxu0 0
        %1488 = vmatpush1.bf16.msra.mxu0 %v1485
        %1489 = vmatprep.subr.bf16.mxu0 0
        %1490 = vmatpush1.bf16.msra.mxu0 0
        %1491 = vmatprep.subr.bf16.mxu0 0
        %1492 = vmatpush1.bf16.msra.mxu0 0
        %1493 = vmatprep.subr.bf16.mxu0 0
        %1494 = vmatpush1.bf16.msra.mxu0 0
        %1495 = vmatprep.subr.bf16.mxu0 0
        %1496 = vmatpush1.bf16.msra.mxu0 0
        %1497 = vmatprep.subr.bf16.mxu0 0
        %1498 = vmatpush1.bf16.msra.mxu0 0
        %1499 = vmatprep.subr.bf16.mxu0 0
        %1500 = vmatpush1.bf16.msra.mxu0 0
        %1501 = vmatprep.subr.bf16.mxu0 0
        %1502 = vmatpush1.bf16.msra.mxu0 0
        %1503 = vmatprep.subr.bf16.mxu0 0
        %1504 = vmatpush1.bf16.msra.mxu0 0
        %1505 = vmatprep.subr.bf16.mxu0 0
        %1506 = vmatpush1.bf16.msra.mxu0 0
        %1507 = vmatprep.subr.bf16.mxu0 0
        %1508 = vmatpush1.bf16.msra.mxu0 0
        %1509 = vmatprep.subr.bf16.mxu0 0
        %1510 = vmatpush1.bf16.msra.mxu0 0
        %1511 = vmatprep.subr.bf16.mxu0 0
        %1512 = vmatpush1.bf16.msra.mxu0 0
        %1513 = vmatprep.subr.bf16.mxu0 0
        %1514 = vmatpush1.bf16.msra.mxu0 0
        %1515 = vmatprep.subr.bf16.mxu0 0
        %1516 = vmatpush1.bf16.msra.mxu0 0
        %1517 = vmatprep.subr.bf16.mxu0 0
        %1518 = vmatpush1.bf16.msra.mxu0 0
        %1519 = vmatprep.mubr.bf16.mxu0 0
        %1520 = vmatmul.mubr.bf16.gmra.mrb[0].mxu0 %v1482
        %v1521 = vpop.f32.mrb[0].mxu0
        %v1522 = vadd.f32 0.0, %v1521
        %v1523 = vpop.f32.mrb[0].mxu0
        %v1524 = vpop.f32.mrb[0].mxu0
        %v1525 = vpop.f32.mrb[0].mxu0
        %1526 = vdwg.mxu0
        %v1527 = vpack.c.bf16 %v1522, %v1522
        %v1529 = vunpack.c.l.b16 %v1527
        %v1530 = vpack.c.b16 %v1529, %v1529
        %1531 = vrot.lane.b32.xlu0 %v1530, 28
        %v1532 = vpop.permute.xlu0 %1531
        %vm1534 = vcmask 257248
        %1535 = vst.msk [vmem:[#allocation5] sm:$0xf] %vm1534, %v1532
        %v1536 = vld [vmem:[#allocation5] sm:$0xf]
        %v1537 = vld [vmem:[#allocation14] sm:$0xf]
        %v1538 = vld [vmem:[#allocation14 + $0x4] sm:$0xf]
        %v1539 = vld [vmem:[#allocation14 + $0x8] sm:$0xf]
        %v1540 = vld [vmem:[#allocation14 + $0xc] sm:$0xf]
        %v1541 = vld [vmem:[%s5] sm:$0x1]
        %v1543 = vlaneseq
        %v1544 = vshrl.u32 %v1543, 7
        %v1545 = vsub.s32 0, %v1544
        %v1546 = vrot.slane %v1541, %v1545
        %v1552 = vunpack.c.l.b16 %v1537
        %v1553 = vunpack.c.l.b16 %v1538
        %v1554 = vunpack.c.l.b16 %v1539
        %v1555 = vunpack.c.l.b16 %v1540
        %v1556 = vpack.c.b16 %v1553, %v1552
        %v1557 = vpack.c.b16 %v1555, %v1554
        %v1561 = vsel %vm343, %v1536, 0
        %1563 = vmatprep.subr.bf16.mxu0 0
        %1564 = vmatpush1.bf16.msra.mxu0 %v1556
        %1565 = vmatprep.subr.bf16.mxu0 0
        %1566 = vmatpush1.bf16.msra.mxu0 %v1557
        %1567 = vmatprep.subr.bf16.mxu0 0
        %1568 = vmatpush1.bf16.msra.mxu0 0
        %1569 = vmatprep.subr.bf16.mxu0 0
        %1570 = vmatpush1.bf16.msra.mxu0 0
        %1571 = vmatprep.subr.bf16.mxu0 0
        %1572 = vmatpush1.bf16.msra.mxu0 0
        %1573 = vmatprep.subr.bf16.mxu0 0
        %1574 = vmatpush1.bf16.msra.mxu0 0
        %1575 = vmatprep.subr.bf16.mxu0 0
        %1576 = vmatpush1.bf16.msra.mxu0 0
        %1577 = vmatprep.subr.bf16.mxu0 0
        %1578 = vmatpush1.bf16.msra.mxu0 0
        %1579 = vmatprep.subr.bf16.mxu0 0
        %1580 = vmatpush1.bf16.msra.mxu0 0
        %1581 = vmatprep.subr.bf16.mxu0 0
        %1582 = vmatpush1.bf16.msra.mxu0 0
        %1583 = vmatprep.subr.bf16.mxu0 0
        %1584 = vmatpush1.bf16.msra.mxu0 0
        %1585 = vmatprep.subr.bf16.mxu0 0
        %1586 = vmatpush1.bf16.msra.mxu0 0
        %1587 = vmatprep.subr.bf16.mxu0 0
        %1588 = vmatpush1.bf16.msra.mxu0 0
        %1589 = vmatprep.subr.bf16.mxu0 0
        %1590 = vmatpush1.bf16.msra.mxu0 0
        %1591 = vmatprep.subr.bf16.mxu0 0
        %1592 = vmatpush1.bf16.msra.mxu0 0
        %1593 = vmatprep.subr.bf16.mxu0 0
        %1594 = vmatpush1.bf16.msra.mxu0 0
        %1595 = vmatprep.mubr.bf16.mxu0 0
        %1596 = vmatmul.mubr.bf16.gmra.mrb[0].mxu0 %v1561
        %v1597 = vpop.f32.mrb[0].mxu0
        %v1598 = vadd.f32 %v1546, %v1597
        %v1599 = vpop.f32.mrb[0].mxu0
        %v1600 = vpop.f32.mrb[0].mxu0
        %v1601 = vpop.f32.mrb[0].mxu0
        %1602 = vdwg.mxu0
        %1603 = vst.msk [vmem:[%s324] sm:$0xff] %vm343, %v1598
        %s1604 = sand.u32 %s164, 1
        %s1605 = scalar_lea.sflag [#allocation8], %s1604
        %s1606 = sand.u32 %s164, 1
        %s1607 = smul.addr %s1606, 8
        %s1608 = scalar_lea.vmem [#allocation15], %s1607
        // Predicated region
        $region65: #{tpu_custom_call.1} parent=43 // pred_check
          %p1609 = pneg %p174
        $region66: #{tpu_custom_call.1} parent=43 // pred_check_branch
          %1611 = sbr.rel (%p1609) target = $region68
        $region67: #{tpu_custom_call.1} parent=43 // pred_region
          %s1613 = ssub.s32 128, 128
          %1614 = vsyncadd %s1605, %s1613
          %s1615 = smul.addr %s25, 128
          %s1616 = scalar_lea.hbm %s6, %s1615
          %s1618 = sshll.u32 %s1608, 4
          %s1619 = int_to_ptr.vmem [resolvable:$true] %s1618
          %1621 = dma.vmem_to_hbm [thread:$0]  %s1619, 128, %s1616, %s1605
        $region68: #{tpu_custom_call.1} parent=43 // pred_fallthru
          _
      $region44: #{tpu_custom_call.1} parent=5 // pred_fallthru
        _
      %p1622 = scmp.le.s32.totalorder 2, %s20
      // Predicated region
      $region69: #{tpu_custom_call.1} parent=5 // pred_check
        %p1623 = pneg %p1622
      $region70: #{tpu_custom_call.1} parent=5 // pred_check_branch
        %1625 = sbr.rel (%p1623) target = $region72
      $region71: #{tpu_custom_call.1} parent=5 // pred_region
        %s1626 = ssub.s32 %s20, 2
        // Predicated region
        $region73: #{tpu_custom_call.1} parent=71 // pred_check
          %p1627 = pneg %p180
        $region74: #{tpu_custom_call.1} parent=71 // pred_check_branch
          %1629 = sbr.rel (%p1627) target = $region76
        $region75: #{tpu_custom_call.1} parent=71 // pred_region
          %s1630 = sand.u32 %s165, 1
          %s1631 = scalar_lea.sflag [#allocation8], %s1630
          %s1632 = sand.u32 %s165, 1
          %s1633 = smul.addr %s1632, 8
          %s1634 = scalar_lea.vmem [#allocation15], %s1633
          %1635 = dma.done %s1631, 128
        $region76: #{tpu_custom_call.1} parent=71 // pred_fallthru
          _
      $region72: #{tpu_custom_call.1} parent=5 // pred_fallthru
        _
    $region6: #{tpu_custom_call.1} parent=1 // loop_footer
      %s24 = sadd.s32 1, %s20
    $region7: #{tpu_custom_call.1} parent=1 // loop_footer_branch
      %19 = sbr.rel target = $region3
    $region8: #{tpu_custom_call.1} parent=1 // loop_exit
      _
    %1636 = vsyncpa [#allocation7], 1
    %s1637 = scalar_lea.sflag [#allocation7], 1
    %1638 = vsyncpa %s1637, 1
    %1639 = vsyncpa [#allocation10], 1
    %1640 = vsyncpa [#allocation13], 1
    %1641 = vsyncpa [#allocation8], 1
    %s1642 = scalar_lea.sflag [#allocation8], 1
    %1643 = vsyncpa %s1642, 1

</llo_original>
